<compile_context>
chip_gen: v7x
topology: tpu7x:2x2x1
jax: 0.10.0
libtpu: 0.0.40
codegen_flags: <defaults>
</compile_context>

<pallas_src>
import jax
import jax.numpy as jnp
import numpy as np
from jax.experimental import pallas as pl
from jax.scipy.linalg import block_diag

# ---------------- configuration (small synthetic sizes) ----------------
B = 8            # batch
T = 2            # task_num
E = 3            # expert_num
DIN = 32         # input_dim
H_EXP = 32       # expert hidden
D_EXP = 16       # expert output dim (expert_config.layers[-1])
H_GATE = 16      # gate hidden
G = (T + 1) * E  # gate output dim (= 9)
H_TASK = 16      # tower hidden
TASK_OUT = 8     # tower output dim (task_config.layers[-1])
NG = T + 1       # number of expert groups

N_EXP_H = NG * E * H_EXP    # 288  expert hidden slab width
N_GATE_H = T * H_GATE       # 32   gate hidden slab width
N_EMB = G * D_EXP           # 144  expert embedding slab width
N_GLOG = T * G              # 18   gate logit slab width
N_PROD = T * G * D_EXP      # 288  expanded gating product width
N_AGG = T * D_EXP           # 32   aggregated embedding width


# ---------------- single fused kernel (grid = (), everything in VMEM/vregs) ----------------
def _stem_kernel(x_ref,
                 w1_ref, b1_ref, w2_ref, b2_ref,
                 segsum_ref, expand_ref, tile_ref, reduce_ref, dexp_ref,
                 tw1_ref, tb1_ref, tw2_ref, tb2_ref,
                 out_ref):
    f32 = jnp.float32
    x = x_ref[...]                                                  # [B, NG*DIN] = [8, 96]

    # ---- merged expert+gate layer 1: one lane-dense MXU matmul + one relu ----
    h1 = jnp.dot(x, w1_ref[...], preferred_element_type=f32) + b1_ref[...]
    h1 = jnp.maximum(h1, 0.0)                                       # [B, 288+32] = [8, 320]

    # ---- merged expert+gate layer 2 (block-diagonal) ----
    s2 = jnp.dot(h1, w2_ref[...], preferred_element_type=f32) + b2_ref[...]   # [8, 162]
    emb = jnp.maximum(s2[:, :N_EMB], 0.0)                           # [B, 144]  (relu'd experts)
    glog = s2[:, N_EMB:]                                            # [B, 18]   (raw gate logits)

    # ---- softmax over each task's G logits, formulated as MXU segment ops ----
    m = jnp.max(glog, axis=-1, keepdims=True)                       # shift-invariant global row max
    eg = jnp.exp(glog - m)                                          # [B, 18]
    denom = jnp.dot(eg, segsum_ref[...], preferred_element_type=f32)          # [B, T]
    inv = pl.reciprocal(denom, approx=False)                        # exact (EUP), per review note

    # ---- gated aggregation: (eg broadcast over D) * (emb tiled over T), segment-summed ----
    prod = (jnp.dot(eg, expand_ref[...], preferred_element_type=f32) *
            jnp.dot(emb, tile_ref[...], preferred_element_type=f32))          # [B, 288]
    agg_u = jnp.dot(prod, reduce_ref[...], preferred_element_type=f32)        # [B, T*D_EXP]
    agg = agg_u * jnp.dot(inv, dexp_ref[...], preferred_element_type=f32)     # normalised [B, 32]

    # ---- per-task towers: packed block-diagonal 2-layer MLP, single store ----
    th = jnp.dot(agg, tw1_ref[...], preferred_element_type=f32) + tb1_ref[...]
    th = jnp.maximum(th, 0.0)                                       # [B, T*H_TASK]
    y = jnp.dot(th, tw2_ref[...], preferred_element_type=f32) + tb2_ref[...]
    out_ref[...] = jnp.maximum(y, 0.0)                              # [B, T*TASK_OUT]


def stem_forward(x_btd, pk):
    # x_btd: [B, T+1, DIN] (PyTorch convention). Trailing-dim collapse is free.
    x_flat = x_btd.reshape(B, NG * DIN)
    # grid=() single invocation: all (tiny, ~0.3 MiB) weights land in VMEM once.
    # When batch scales: add grid=(B//TB,), x/out BlockSpecs tiled on batch with
    # TB>=128, weights as full-array specs (index_map -> (0,0)), set
    # compiler_params=pltpu.CompilerParams(dimension_semantics=("parallel",))
    # for v7x's 2 TCs, and cast MXU operands to bf16 on v6e/v7x.
    return pl.pallas_call(
        _stem_kernel,
        out_shape=jax.ShapeDtypeStruct((B, T * TASK_OUT), jnp.float32),
    )(x_flat,
      pk["w1"], pk["b1"], pk["w2"], pk["b2"],
      pk["segsum"], pk["expand"], pk["tile"], pk["reduce"], pk["dexp"],
      pk["tw1"], pk["tb1"], pk["tw2"], pk["tb2"])


# ---------------- one-time weight packing (outside the jitted forward) ----------------
def pack_params(p):
    # Experts layer 1: per-group [DIN, E*H_EXP] blocks -> block-diag over groups.
    ew1_bd = block_diag(*[p["ew1"][g].transpose(1, 0, 2).reshape(DIN, E * H_EXP)
                          for g in range(NG)])                      # [NG*DIN, 288]

    # Gates layer 1 with the shared-input add folded into the row layout:
    # row-block 0 holds every gate's W1 (x_shared path), row-block t+1 holds gw1[t].
    gw1_np = np.asarray(p["gw1"], dtype=np.float32)
    gw1_packed = np.zeros((NG * DIN, T * H_GATE), np.float32)
    for t in range(T):
        gw1_packed[0:DIN, t * H_GATE:(t + 1) * H_GATE] = gw1_np[t]
        gw1_packed[(t + 1) * DIN:(t + 2) * DIN, t * H_GATE:(t + 1) * H_GATE] = gw1_np[t]

    w1 = jnp.concatenate([ew1_bd, jnp.asarray(gw1_packed)], axis=1)            # [96, 320]
    b1 = jnp.concatenate([p["eb1"].reshape(1, -1), p["gb1"].reshape(1, -1)], 1)  # [1, 320]

    # Layer 2: experts block-diag per expert, gates block-diag per task, merged.
    ew2_blocks = p["ew2"].reshape(NG * E, H_EXP, D_EXP)
    ew2_bd = block_diag(*[ew2_blocks[i] for i in range(NG * E)])    # [288, 144]
    gw2_bd = block_diag(*[p["gw2"][t] for t in range(T)])           # [32, 18]
    w2 = block_diag(ew2_bd, gw2_bd)                                 # [320, 162]
    b2 = jnp.concatenate([p["eb2"].reshape(1, -1), p["gb2"].reshape(1, -1)], 1)  # [1, 162]

    # 0/1 matrices for softmax segment-sum + gated aggregation on the MXU.
    segsum = np.kron(np.eye(T, dtype=np.float32), np.ones((G, 1), np.float32))       # [18, 2]
    expand = np.kron(np.eye(T * G, dtype=np.float32), np.ones((1, D_EXP), np.float32))  # [18, 288]
    tile = np.tile(np.eye(G * D_EXP, dtype=np.float32), (1, T))                      # [144, 288]
    reduce_m = np.kron(np.eye(T, dtype=np.float32),
                       np.tile(np.eye(D_EXP, dtype=np.float32), (G, 1)))             # [288, 32]
    dexp = np.kron(np.eye(T, dtype=np.float32), np.ones((1, D_EXP), np.float32))     # [2, 32]

    # Towers: block-diag per task.
    tw1_bd = block_diag(*[p["tw1"][t] for t in range(T)])           # [32, 32]
    tw2_bd = block_diag(*[p["tw2"][t] for t in range(T)])           # [32, 16]

    return {
        "w1": w1, "b1": b1, "w2": w2, "b2": b2,
        "segsum": jnp.asarray(segsum), "expand": jnp.asarray(expand),
        "tile": jnp.asarray(tile), "reduce": jnp.asarray(reduce_m),
        "dexp": jnp.asarray(dexp),
        "tw1": tw1_bd, "tb1": p["tb1"].reshape(1, -1),
        "tw2": tw2_bd, "tb2": p["tb2"].reshape(1, -1),
    }


# ---------------- pure-JAX reference (unpacked weights) ----------------
def stem_reference(x_btd, p):
    outs = []
    embs = []
    for g in range(NG):
        xg = x_btd[:, g, :]
        per_e = []
        for e in range(E):
            h = jnp.maximum(xg @ p["ew1"][g, e] + p["eb1"][g, e, 0], 0.0)
            per_e.append(jnp.maximum(h @ p["ew2"][g, e] + p["eb2"][g, e, 0], 0.0))
        embs.append(jnp.stack(per_e, axis=1))                       # [B, E, D]
    emb_cat = jnp.stack(embs, axis=1).reshape(B, G, D_EXP)
    for t in range(T):
        x = x_btd[:, t + 1, :] + x_btd[:, 0, :]
        h = jnp.maximum(x @ p["gw1"][t] + p["gb1"][t, 0], 0.0)
        gw = jax.nn.softmax(h @ p["gw2"][t] + p["gb2"][t, 0], axis=-1)
        agg = jnp.sum(gw[:, :, None] * emb_cat, axis=1)
        h = jnp.maximum(agg @ p["tw1"][t] + p["tb1"][t, 0], 0.0)
        outs.append(jnp.maximum(h @ p["tw2"][t] + p["tb2"][t, 0], 0.0))
    return jnp.concatenate(outs, axis=1)


def init_params(key):
    ks = jax.random.split(key, 12)
    n = lambda k, s: (0.1 * jax.random.normal(k, s)).astype(jnp.float32)
    return {
        "ew1": n(ks[0], (NG, E, DIN, H_EXP)),
        "eb1": n(ks[1], (NG, E, 1, H_EXP)),
        "ew2": n(ks[2], (NG, E, H_EXP, D_EXP)),
        "eb2": n(ks[3], (NG, E, 1, D_EXP)),
        "gw1": n(ks[4], (T, DIN, H_GATE)),
        "gb1": n(ks[5], (T, 1, H_GATE)),
        "gw2": n(ks[6], (T, H_GATE, G)),
        "gb2": n(ks[7], (T, 1, G)),
        "tw1": n(ks[8], (T, D_EXP, H_TASK)),
        "tb1": n(ks[9], (T, 1, H_TASK)),
        "tw2": n(ks[10], (T, H_TASK, TASK_OUT)),
        "tb2": n(ks[11], (T, 1, TASK_OUT)),
    }


if __name__ == "__main__":
    key = jax.random.PRNGKey(0)
    k_x, k_p = jax.random.split(key)
    x = jax.random.normal(k_x, (B, T + 1, DIN), dtype=jnp.float32)
    params = init_params(k_p)
    packed = pack_params(params)          # one-time packing, not in the jitted path

    out = jax.jit(stem_forward)(x, packed)
    out = jax.block_until_ready(out)

    ref = stem_reference(x, params)
    assert out.shape == (B, T * TASK_OUT), out.shape
    assert jnp.allclose(out, ref, atol=2e-3, rtol=2e-3), float(jnp.max(jnp.abs(out - ref)))
    print("KERNEL_OK")
</pallas_src>

<mosaic_0001>
module attributes {stable_mosaic.version = 11 : i64} {
  func.func @_stem_kernel(%arg0: memref<8x96xf32, #tpu.memory_space<vmem>>, %arg1: memref<96x320xf32, #tpu.memory_space<vmem>>, %arg2: memref<1x320xf32, #tpu.memory_space<vmem>>, %arg3: memref<320x162xf32, #tpu.memory_space<vmem>>, %arg4: memref<1x162xf32, #tpu.memory_space<vmem>>, %arg5: memref<18x2xf32, #tpu.memory_space<vmem>>, %arg6: memref<18x288xf32, #tpu.memory_space<vmem>>, %arg7: memref<144x288xf32, #tpu.memory_space<vmem>>, %arg8: memref<288x32xf32, #tpu.memory_space<vmem>>, %arg9: memref<2x32xf32, #tpu.memory_space<vmem>>, %arg10: memref<32x32xf32, #tpu.memory_space<vmem>>, %arg11: memref<1x32xf32, #tpu.memory_space<vmem>>, %arg12: memref<32x16xf32, #tpu.memory_space<vmem>>, %arg13: memref<1x16xf32, #tpu.memory_space<vmem>>, %arg14: memref<8x16xf32, #tpu.memory_space<vmem>>) attributes {dimension_semantics = [], scalar_prefetch = 0 : i64, scratch_operands = 0 : i64, tpu.core_type = #tpu.core_type<tc>} {
    %c0 = arith.constant 0 : index
    %c0_0 = arith.constant 0 : index
    %0 = vector.load %arg0[%c0, %c0_0] : memref<8x96xf32, #tpu.memory_space<vmem>>, vector<8x96xf32>
    %c0_1 = arith.constant 0 : index
    %c0_2 = arith.constant 0 : index
    %1 = vector.load %arg1[%c0_1, %c0_2] : memref<96x320xf32, #tpu.memory_space<vmem>>, vector<96x320xf32>
    %cst = arith.constant dense<0.000000e+00> : vector<8x320xf32>
    %2 = tpu.matmul %0, %1, %cst {dimension_numbers = #tpu.dot_dimension_numbers<[1], [0], [0], [1], [0, 0, 1, 1], [], []>} : vector<8x96xf32>, vector<96x320xf32>, vector<8x320xf32> -> vector<8x320xf32>
    %c0_3 = arith.constant 0 : index
    %c0_4 = arith.constant 0 : index
    %3 = vector.load %arg2[%c0_3, %c0_4] : memref<1x320xf32, #tpu.memory_space<vmem>>, vector<1x320xf32>
    %4 = vector.broadcast %3 : vector<1x320xf32> to vector<8x320xf32>
    %5 = arith.addf %2, %4 : vector<8x320xf32>
    %cst_5 = arith.constant 0.000000e+00 : f32
    %6 = vector.broadcast %cst_5 : f32 to vector<8x320xf32>
    %7 = arith.maximumf %5, %6 : vector<8x320xf32>
    %c0_6 = arith.constant 0 : index
    %c0_7 = arith.constant 0 : index
    %8 = vector.load %arg3[%c0_6, %c0_7] : memref<320x162xf32, #tpu.memory_space<vmem>>, vector<320x162xf32>
    %cst_8 = arith.constant dense<0.000000e+00> : vector<8x162xf32>
    %9 = tpu.matmul %7, %8, %cst_8 {dimension_numbers = #tpu.dot_dimension_numbers<[1], [0], [0], [1], [0, 0, 1, 1], [], []>} : vector<8x320xf32>, vector<320x162xf32>, vector<8x162xf32> -> vector<8x162xf32>
    %c0_9 = arith.constant 0 : index
    %c0_10 = arith.constant 0 : index
    %10 = vector.load %arg4[%c0_9, %c0_10] : memref<1x162xf32, #tpu.memory_space<vmem>>, vector<1x162xf32>
    %11 = vector.broadcast %10 : vector<1x162xf32> to vector<8x162xf32>
    %12 = arith.addf %9, %11 : vector<8x162xf32>
    %13 = vector.extract_strided_slice %12 {offsets = [0, 0], sizes = [8, 144], strides = [1, 1]} : vector<8x162xf32> to vector<8x144xf32>
    %cst_11 = arith.constant 0.000000e+00 : f32
    %14 = vector.broadcast %cst_11 : f32 to vector<8x144xf32>
    %15 = arith.maximumf %13, %14 : vector<8x144xf32>
    %16 = vector.extract_strided_slice %12 {offsets = [0, 144], sizes = [8, 18], strides = [1, 1]} : vector<8x162xf32> to vector<8x18xf32>
    %cst_12 = arith.constant dense<0xFF800000> : vector<8xf32>
    %17 = vector.multi_reduction <maximumf>, %16, %cst_12 [1] : vector<8x18xf32> to vector<8xf32>
    %18 = vector.shape_cast %17 : vector<8xf32> to vector<8x1xf32>
    %19 = vector.broadcast %18 : vector<8x1xf32> to vector<8x18xf32>
    %20 = arith.subf %16, %19 : vector<8x18xf32>
    %21 = math.exp %20 : vector<8x18xf32>
    %c0_13 = arith.constant 0 : index
    %c0_14 = arith.constant 0 : index
    %22 = vector.load %arg5[%c0_13, %c0_14] : memref<18x2xf32, #tpu.memory_space<vmem>>, vector<18x2xf32>
    %cst_15 = arith.constant dense<0.000000e+00> : vector<8x2xf32>
    %23 = tpu.matmul %21, %22, %cst_15 {dimension_numbers = #tpu.dot_dimension_numbers<[1], [0], [0], [1], [0, 0, 1, 1], [], []>} : vector<8x18xf32>, vector<18x2xf32>, vector<8x2xf32> -> vector<8x2xf32>
    %24 = tpu.reciprocal %23 : vector<8x2xf32> -> vector<8x2xf32>
    %c0_16 = arith.constant 0 : index
    %c0_17 = arith.constant 0 : index
    %25 = vector.load %arg6[%c0_16, %c0_17] : memref<18x288xf32, #tpu.memory_space<vmem>>, vector<18x288xf32>
    %cst_18 = arith.constant dense<0.000000e+00> : vector<8x288xf32>
    %26 = tpu.matmul %21, %25, %cst_18 {dimension_numbers = #tpu.dot_dimension_numbers<[1], [0], [0], [1], [0, 0, 1, 1], [], []>} : vector<8x18xf32>, vector<18x288xf32>, vector<8x288xf32> -> vector<8x288xf32>
    %c0_19 = arith.constant 0 : index
    %c0_20 = arith.constant 0 : index
    %27 = vector.load %arg7[%c0_19, %c0_20] : memref<144x288xf32, #tpu.memory_space<vmem>>, vector<144x288xf32>
    %cst_21 = arith.constant dense<0.000000e+00> : vector<8x288xf32>
    %28 = tpu.matmul %15, %27, %cst_21 {dimension_numbers = #tpu.dot_dimension_numbers<[1], [0], [0], [1], [0, 0, 1, 1], [], []>} : vector<8x144xf32>, vector<144x288xf32>, vector<8x288xf32> -> vector<8x288xf32>
    %29 = arith.mulf %26, %28 : vector<8x288xf32>
    %c0_22 = arith.constant 0 : index
    %c0_23 = arith.constant 0 : index
    %30 = vector.load %arg8[%c0_22, %c0_23] : memref<288x32xf32, #tpu.memory_space<vmem>>, vector<288x32xf32>
    %cst_24 = arith.constant dense<0.000000e+00> : vector<8x32xf32>
    %31 = tpu.matmul %29, %30, %cst_24 {dimension_numbers = #tpu.dot_dimension_numbers<[1], [0], [0], [1], [0, 0, 1, 1], [], []>} : vector<8x288xf32>, vector<288x32xf32>, vector<8x32xf32> -> vector<8x32xf32>
    %c0_25 = arith.constant 0 : index
    %c0_26 = arith.constant 0 : index
    %32 = vector.load %arg9[%c0_25, %c0_26] : memref<2x32xf32, #tpu.memory_space<vmem>>, vector<2x32xf32>
    %cst_27 = arith.constant dense<0.000000e+00> : vector<8x32xf32>
    %33 = tpu.matmul %24, %32, %cst_27 {dimension_numbers = #tpu.dot_dimension_numbers<[1], [0], [0], [1], [0, 0, 1, 1], [], []>} : vector<8x2xf32>, vector<2x32xf32>, vector<8x32xf32> -> vector<8x32xf32>
    %34 = arith.mulf %31, %33 : vector<8x32xf32>
    %c0_28 = arith.constant 0 : index
    %c0_29 = arith.constant 0 : index
    %35 = vector.load %arg10[%c0_28, %c0_29] : memref<32x32xf32, #tpu.memory_space<vmem>>, vector<32x32xf32>
    %cst_30 = arith.constant dense<0.000000e+00> : vector<8x32xf32>
    %36 = tpu.matmul %34, %35, %cst_30 {dimension_numbers = #tpu.dot_dimension_numbers<[1], [0], [0], [1], [0, 0, 1, 1], [], []>} : vector<8x32xf32>, vector<32x32xf32>, vector<8x32xf32> -> vector<8x32xf32>
    %c0_31 = arith.constant 0 : index
    %c0_32 = arith.constant 0 : index
    %37 = vector.load %arg11[%c0_31, %c0_32] : memref<1x32xf32, #tpu.memory_space<vmem>>, vector<1x32xf32>
    %38 = vector.broadcast %37 : vector<1x32xf32> to vector<8x32xf32>
    %39 = arith.addf %36, %38 : vector<8x32xf32>
    %cst_33 = arith.constant 0.000000e+00 : f32
    %40 = vector.broadcast %cst_33 : f32 to vector<8x32xf32>
    %41 = arith.maximumf %39, %40 : vector<8x32xf32>
    %c0_34 = arith.constant 0 : index
    %c0_35 = arith.constant 0 : index
    %42 = vector.load %arg12[%c0_34, %c0_35] : memref<32x16xf32, #tpu.memory_space<vmem>>, vector<32x16xf32>
    %cst_36 = arith.constant dense<0.000000e+00> : vector<8x16xf32>
    %43 = tpu.matmul %41, %42, %cst_36 {dimension_numbers = #tpu.dot_dimension_numbers<[1], [0], [0], [1], [0, 0, 1, 1], [], []>} : vector<8x32xf32>, vector<32x16xf32>, vector<8x16xf32> -> vector<8x16xf32>
    %c0_37 = arith.constant 0 : index
    %c0_38 = arith.constant 0 : index
    %44 = vector.load %arg13[%c0_37, %c0_38] : memref<1x16xf32, #tpu.memory_space<vmem>>, vector<1x16xf32>
    %45 = vector.broadcast %44 : vector<1x16xf32> to vector<8x16xf32>
    %46 = arith.addf %43, %45 : vector<8x16xf32>
    %cst_39 = arith.constant 0.000000e+00 : f32
    %47 = vector.broadcast %cst_39 : f32 to vector<8x16xf32>
    %48 = arith.maximumf %46, %47 : vector<8x16xf32>
    %c0_40 = arith.constant 0 : index
    %c0_41 = arith.constant 0 : index
    %49 = vector.load %arg14[%c0_40, %c0_41] : memref<8x16xf32, #tpu.memory_space<vmem>>, vector<8x16xf32>
    tpu.vector_store %arg14[%c0_40, %c0_41], %48 {strides = array<i32>} : memref<8x16xf32, #tpu.memory_space<vmem>>, vector<8x16xf32>,
    return
  }
}

</mosaic_0001>

<llo_original>
// kernel: stem_forward.1
$region0: #{stem_forward.1}
  #allocation0 [shape = 'u32[]', space=smem, size = 0x4, offset = 0x4, fixed_abs, tag = 'smem constant byte address 0x4 - core index']
  #allocation1 [shape = 'u32[144,128]{1,0:T(1,128)}', space=vmem, size = 0x12000, scoped, tag = 'internal scratch']
  %s0 = inlined_call_operand.vmem [shape: f32[8,96], index: 0, kind: input, shape index: {}]
  %s1 = inlined_call_operand.vmem [shape: f32[96,320], index: 1, kind: input, shape index: {}]
  %s2 = inlined_call_operand.vmem [shape: f32[1,320], index: 2, kind: input, shape index: {}]
  %s3 = inlined_call_operand.vmem [shape: f32[320,162], index: 3, kind: input, shape index: {}]
  %s4 = inlined_call_operand.vmem [shape: f32[1,162], index: 4, kind: input, shape index: {}]
  %s5 = inlined_call_operand.vmem [shape: f32[18,2], index: 5, kind: input, shape index: {}]
  %s6 = inlined_call_operand.vmem [shape: f32[18,288], index: 6, kind: input, shape index: {}]
  %s7 = inlined_call_operand.vmem [shape: f32[144,288], index: 7, kind: input, shape index: {}]
  %s8 = inlined_call_operand.vmem [shape: f32[288,32], index: 8, kind: input, shape index: {}]
  %s9 = inlined_call_operand.vmem [shape: f32[2,32], index: 9, kind: input, shape index: {}]
  %s10 = inlined_call_operand.vmem [shape: f32[32,32], index: 10, kind: input, shape index: {}]
  %s11 = inlined_call_operand.vmem [shape: f32[1,32], index: 11, kind: input, shape index: {}]
  %s12 = inlined_call_operand.vmem [shape: f32[32,16], index: 12, kind: input, shape index: {}]
  %s13 = inlined_call_operand.vmem [shape: f32[1,16], index: 13, kind: input, shape index: {}]
  %s14 = inlined_call_operand.hbm [shape: f32[8,16], index: 14, kind: output, shape index: {}]
  %s15 = sld [smem:[#allocation0]]
  $region66: #{stem_forward.1} parent=0
    _
  %s17 = ssub.s32 1, %s15
  %s18 = scalar_select 0, %s17, %s15
  $region1: #{stem_forward.1} parent=0
    #allocation2 [shape = 'u8[4096]{0}', space=vmem, size = 0x1000, scoped, tag = 'output window, operand 0, single buffered']
    #allocation3 [shape = 's32[1]{0}', space=sflag, size = 0x4, scoped, tag = 'scoped memory for stem_forward.1']
    %19 = vsyncpa [#allocation3], 0
    // Predicated region
    $region2: #{stem_forward.1} parent=1 // pred_check
      _
    $region3: #{stem_forward.1} parent=1 // pred_check_branch
      %21 = sbr.rel (0) target = $region5
    $region4: #{stem_forward.1} parent=1 // pred_region
      _
    $region5: #{stem_forward.1} parent=1 // pred_fallthru
      _
    // Predicated region
    $region6: #{stem_forward.1} parent=1 // pred_check
      _
    $region7: #{stem_forward.1} parent=1 // pred_check_branch
      %23 = sbr.rel (0) target = $region9
    $region8: #{stem_forward.1} parent=1 // pred_region
      _
    $region9: #{stem_forward.1} parent=1 // pred_fallthru
      _
    // Predicated region
    $region10: #{stem_forward.1} parent=1 // pred_check
      _
    $region11: #{stem_forward.1} parent=1 // pred_check_branch
      %25 = sbr.rel (0) target = $region13
    $region12: #{stem_forward.1} parent=1 // pred_region
      _
    $region13: #{stem_forward.1} parent=1 // pred_fallthru
      _
    // Predicated region
    $region14: #{stem_forward.1} parent=1 // pred_check
      _
    $region15: #{stem_forward.1} parent=1 // pred_check_branch
      %27 = sbr.rel (0) target = $region17
    $region16: #{stem_forward.1} parent=1 // pred_region
      _
    $region17: #{stem_forward.1} parent=1 // pred_fallthru
      _
    // Predicated region
    $region18: #{stem_forward.1} parent=1 // pred_check
      _
    $region19: #{stem_forward.1} parent=1 // pred_check_branch
      %29 = sbr.rel (0) target = $region21
    $region20: #{stem_forward.1} parent=1 // pred_region
      _
    $region21: #{stem_forward.1} parent=1 // pred_fallthru
      _
    // Predicated region
    $region22: #{stem_forward.1} parent=1 // pred_check
      _
    $region23: #{stem_forward.1} parent=1 // pred_check_branch
      %31 = sbr.rel (0) target = $region25
    $region24: #{stem_forward.1} parent=1 // pred_region
      _
    $region25: #{stem_forward.1} parent=1 // pred_fallthru
      _
    // Predicated region
    $region26: #{stem_forward.1} parent=1 // pred_check
      _
    $region27: #{stem_forward.1} parent=1 // pred_check_branch
      %33 = sbr.rel (0) target = $region29
    $region28: #{stem_forward.1} parent=1 // pred_region
      _
    $region29: #{stem_forward.1} parent=1 // pred_fallthru
      _
    // Predicated region
    $region30: #{stem_forward.1} parent=1 // pred_check
      _
    $region31: #{stem_forward.1} parent=1 // pred_check_branch
      %35 = sbr.rel (0) target = $region33
    $region32: #{stem_forward.1} parent=1 // pred_region
      _
    $region33: #{stem_forward.1} parent=1 // pred_fallthru
      _
    // Predicated region
    $region34: #{stem_forward.1} parent=1 // pred_check
      _
    $region35: #{stem_forward.1} parent=1 // pred_check_branch
      %37 = sbr.rel (0) target = $region37
    $region36: #{stem_forward.1} parent=1 // pred_region
      _
    $region37: #{stem_forward.1} parent=1 // pred_fallthru
      _
    // Predicated region
    $region38: #{stem_forward.1} parent=1 // pred_check
      _
    $region39: #{stem_forward.1} parent=1 // pred_check_branch
      %39 = sbr.rel (0) target = $region41
    $region40: #{stem_forward.1} parent=1 // pred_region
      _
    $region41: #{stem_forward.1} parent=1 // pred_fallthru
      _
    // Predicated region
    $region42: #{stem_forward.1} parent=1 // pred_check
      _
    $region43: #{stem_forward.1} parent=1 // pred_check_branch
      %41 = sbr.rel (0) target = $region45
    $region44: #{stem_forward.1} parent=1 // pred_region
      _
    $region45: #{stem_forward.1} parent=1 // pred_fallthru
      _
    // Predicated region
    $region46: #{stem_forward.1} parent=1 // pred_check
      _
    $region47: #{stem_forward.1} parent=1 // pred_check_branch
      %43 = sbr.rel (0) target = $region49
    $region48: #{stem_forward.1} parent=1 // pred_region
      _
    $region49: #{stem_forward.1} parent=1 // pred_fallthru
      _
    // Predicated region
    $region50: #{stem_forward.1} parent=1 // pred_check
      _
    $region51: #{stem_forward.1} parent=1 // pred_check_branch
      %45 = sbr.rel (0) target = $region53
    $region52: #{stem_forward.1} parent=1 // pred_region
      _
    $region53: #{stem_forward.1} parent=1 // pred_fallthru
      _
    // Predicated region
    $region54: #{stem_forward.1} parent=1 // pred_check
      _
    $region55: #{stem_forward.1} parent=1 // pred_check_branch
      %47 = sbr.rel (0) target = $region57
    $region56: #{stem_forward.1} parent=1 // pred_region
      _
    $region57: #{stem_forward.1} parent=1 // pred_fallthru
      _
    %v48 = vld [vmem:[%s0] sm:$0xff]
    %v49 = vld [vmem:[%s1] sm:$0xff]
    %v50 = vld [vmem:[%s1 + $0x8] sm:$0xff]
    %v51 = vld [vmem:[%s1 + $0x10] sm:$0xff]
    %v52 = vld [vmem:[%s1 + $0x18] sm:$0xff]
    %v53 = vld [vmem:[%s1 + $0x20] sm:$0xff]
    %v54 = vld [vmem:[%s1 + $0x28] sm:$0xff]
    %v55 = vld [vmem:[%s1 + $0x30] sm:$0xff]
    %v56 = vld [vmem:[%s1 + $0x38] sm:$0xff]
    %v57 = vld [vmem:[%s1 + $0x40] sm:$0xff]
    %v58 = vld [vmem:[%s1 + $0x48] sm:$0xff]
    %v59 = vld [vmem:[%s1 + $0x50] sm:$0xff]
    %v60 = vld [vmem:[%s1 + $0x58] sm:$0xff]
    %v61 = vld [vmem:[%s1 + $0x60] sm:$0xff]
    %v62 = vld [vmem:[%s1 + $0x68] sm:$0xff]
    %v63 = vld [vmem:[%s1 + $0x70] sm:$0xff]
    %v64 = vld [vmem:[%s1 + $0x78] sm:$0xff]
    %v65 = vld [vmem:[%s1 + $0x80] sm:$0xff]
    %v66 = vld [vmem:[%s1 + $0x88] sm:$0xff]
    %v67 = vld [vmem:[%s1 + $0x90] sm:$0xff]
    %v68 = vld [vmem:[%s1 + $0x98] sm:$0xff]
    %v69 = vld [vmem:[%s1 + $0xa0] sm:$0xff]
    %v70 = vld [vmem:[%s1 + $0xa8] sm:$0xff]
    %v71 = vld [vmem:[%s1 + $0xb0] sm:$0xff]
    %v72 = vld [vmem:[%s1 + $0xb8] sm:$0xff]
    %v73 = vld [vmem:[%s1 + $0xc0] sm:$0xff]
    %v74 = vld [vmem:[%s1 + $0xc8] sm:$0xff]
    %v75 = vld [vmem:[%s1 + $0xd0] sm:$0xff]
    %v76 = vld [vmem:[%s1 + $0xd8] sm:$0xff]
    %v77 = vld [vmem:[%s1 + $0xe0] sm:$0xff]
    %v78 = vld [vmem:[%s1 + $0xe8] sm:$0xff]
    %v79 = vld [vmem:[%s1 + $0xf0] sm:$0xff]
    %v80 = vld [vmem:[%s1 + $0xf8] sm:$0xff]
    %v81 = vld [vmem:[%s1 + $0x100] sm:$0xff]
    %v82 = vld [vmem:[%s1 + $0x108] sm:$0xff]
    %v83 = vld [vmem:[%s1 + $0x110] sm:$0xff]
    %v84 = vld [vmem:[%s1 + $0x118] sm:$0xff]
    %v85 = vld [vmem:[%s2] sm:$0x7]
    %v87 = vlaneseq
    %v88 = vshrl.u32 %v87, 7
    %v89 = vsub.s32 0, %v88
    %v90 = vrot.slane %v85, %v89
    %v91 = vlaneseq
    %v92 = vshrl.u32 %v91, 7
    %v93 = vsub.s32 1, %v92
    %v94 = vrot.slane %v85, %v93
    %v95 = vlaneseq
    %v96 = vshrl.u32 %v95, 7
    %v97 = vsub.s32 2, %v96
    %v98 = vrot.slane %v85, %v97
    %vm102 = vcmask 785408
    %v104 = vsel %vm102, %v48, 0
    %106 = vmatprep.subr.mxu0 %v50
    %107 = vmatpush1.msra.mxu0 %v49
    %108 = vmatprep.subr.mxu0 %v53
    %109 = vmatpush1.msra.mxu0 %v52
    %110 = vmatprep.subr.mxu0 %v56
    %111 = vmatpush1.msra.mxu0 %v55
    %112 = vmatprep.subr.mxu0 %v59
    %113 = vmatpush1.msra.mxu0 %v58
    %114 = vmatprep.subr.mxu0 %v62
    %115 = vmatpush1.msra.mxu0 %v61
    %116 = vmatprep.subr.mxu0 %v65
    %117 = vmatpush1.msra.mxu0 %v64
    %118 = vmatprep.subr.mxu0 %v68
    %119 = vmatpush1.msra.mxu0 %v67
    %120 = vmatprep.subr.mxu0 %v71
    %121 = vmatpush1.msra.mxu0 %v70
    %122 = vmatprep.subr.mxu0 %v74
    %123 = vmatpush1.msra.mxu0 %v73
    %124 = vmatprep.subr.mxu0 %v77
    %125 = vmatpush1.msra.mxu0 %v76
    %126 = vmatprep.subr.mxu0 %v80
    %127 = vmatpush1.msra.mxu0 %v79
    %128 = vmatprep.subr.mxu0 %v83
    %129 = vmatpush1.msra.mxu0 %v82
    %130 = vmatprep.subr.mxu0 0.0
    %131 = vmatpush1.msra.mxu0 0.0
    %132 = vmatprep.subr.mxu0 0.0
    %133 = vmatpush1.msra.mxu0 0.0
    %134 = vmatprep.subr.mxu0 0.0
    %135 = vmatpush1.msra.mxu0 0.0
    %136 = vmatprep.subr.mxu0 0.0
    %137 = vmatpush1.msra.mxu0 0.0
    %138 = vmatprep.subr.mxu0 0.0
    %139 = vmatpush1.msra.mxu0 0.0
    %140 = vmatprep.subr.mxu0 0.0
    %141 = vmatpush1.msra.mxu0 0.0
    %142 = vmatprep.subr.mxu0 0.0
    %143 = vmatpush1.msra.mxu0 0.0
    %144 = vmatprep.subr.mxu0 0.0
    %145 = vmatpush1.msra.mxu0 0.0
    %146 = vmatprep.subr.mxu0 0.0
    %147 = vmatpush1.msra.mxu0 0.0
    %148 = vmatprep.subr.mxu0 0.0
    %149 = vmatpush1.msra.mxu0 0.0
    %150 = vmatprep.subr.mxu0 0.0
    %151 = vmatpush1.msra.mxu0 0.0
    %152 = vmatprep.subr.mxu0 0.0
    %153 = vmatpush1.msra.mxu0 0.0
    %154 = vmatprep.subr.mxu0 0.0
    %155 = vmatpush1.msra.mxu0 0.0
    %156 = vmatprep.subr.mxu0 0.0
    %157 = vmatpush1.msra.mxu0 0.0
    %158 = vmatprep.subr.mxu0 0.0
    %159 = vmatpush1.msra.mxu0 0.0
    %160 = vmatprep.subr.mxu0 0.0
    %161 = vmatpush1.msra.mxu0 0.0
    %162 = vmatprep.subr.mxu0 0.0
    %163 = vmatpush1.msra.mxu0 0.0
    %164 = vmatprep.subr.mxu0 0.0
    %165 = vmatpush1.msra.mxu0 0.0
    %166 = vmatprep.subr.mxu0 0.0
    %167 = vmatpush1.msra.mxu0 0.0
    %168 = vmatprep.subr.mxu0 0.0
    %169 = vmatpush1.msra.mxu0 0.0
    %170 = vmatprep.mubr.f32.mxu0 0.0
    %171 = vmatmul.mubr.f32.gmra.mrb[0].mxu0 %v104
    %v172 = vpop.f32.mrb[0].mxu0
    %v173 = vadd.f32 %v90, %v172
    %v174 = vpop.f32.mrb[0].mxu0
    %v175 = vadd.f32 %v94, %v174
    %176 = vdwg.mxu0
    %177 = vmatprep.subr.mxu0 0.0
    %178 = vmatpush1.msra.mxu0 %v51
    %179 = vmatprep.subr.mxu0 0.0
    %180 = vmatpush1.msra.mxu0 %v54
    %181 = vmatprep.subr.mxu0 0.0
    %182 = vmatpush1.msra.mxu0 %v57
    %183 = vmatprep.subr.mxu0 0.0
    %184 = vmatpush1.msra.mxu0 %v60
    %185 = vmatprep.subr.mxu0 0.0
    %186 = vmatpush1.msra.mxu0 %v63
    %187 = vmatprep.subr.mxu0 0.0
    %188 = vmatpush1.msra.mxu0 %v66
    %189 = vmatprep.subr.mxu0 0.0
    %190 = vmatpush1.msra.mxu0 %v69
    %191 = vmatprep.subr.mxu0 0.0
    %192 = vmatpush1.msra.mxu0 %v72
    %193 = vmatprep.subr.mxu0 0.0
    %194 = vmatpush1.msra.mxu0 %v75
    %195 = vmatprep.subr.mxu0 0.0
    %196 = vmatpush1.msra.mxu0 %v78
    %197 = vmatprep.subr.mxu0 0.0
    %198 = vmatpush1.msra.mxu0 %v81
    %199 = vmatprep.subr.mxu0 0.0
    %200 = vmatpush1.msra.mxu0 %v84
    %201 = vmatprep.subr.mxu0 0.0
    %202 = vmatpush1.msra.mxu0 0.0
    %203 = vmatprep.subr.mxu0 0.0
    %204 = vmatpush1.msra.mxu0 0.0
    %205 = vmatprep.subr.mxu0 0.0
    %206 = vmatpush1.msra.mxu0 0.0
    %207 = vmatprep.subr.mxu0 0.0
    %208 = vmatpush1.msra.mxu0 0.0
    %209 = vmatprep.subr.mxu0 0.0
    %210 = vmatpush1.msra.mxu0 0.0
    %211 = vmatprep.subr.mxu0 0.0
    %212 = vmatpush1.msra.mxu0 0.0
    %213 = vmatprep.subr.mxu0 0.0
    %214 = vmatpush1.msra.mxu0 0.0
    %215 = vmatprep.subr.mxu0 0.0
    %216 = vmatpush1.msra.mxu0 0.0
    %217 = vmatprep.subr.mxu0 0.0
    %218 = vmatpush1.msra.mxu0 0.0
    %219 = vmatprep.subr.mxu0 0.0
    %220 = vmatpush1.msra.mxu0 0.0
    %221 = vmatprep.subr.mxu0 0.0
    %222 = vmatpush1.msra.mxu0 0.0
    %223 = vmatprep.subr.mxu0 0.0
    %224 = vmatpush1.msra.mxu0 0.0
    %225 = vmatprep.subr.mxu0 0.0
    %226 = vmatpush1.msra.mxu0 0.0
    %227 = vmatprep.subr.mxu0 0.0
    %228 = vmatpush1.msra.mxu0 0.0
    %229 = vmatprep.subr.mxu0 0.0
    %230 = vmatpush1.msra.mxu0 0.0
    %231 = vmatprep.subr.mxu0 0.0
    %232 = vmatpush1.msra.mxu0 0.0
    %233 = vmatprep.subr.mxu0 0.0
    %234 = vmatpush1.msra.mxu0 0.0
    %235 = vmatprep.subr.mxu0 0.0
    %236 = vmatpush1.msra.mxu0 0.0
    %237 = vmatprep.subr.mxu0 0.0
    %238 = vmatpush1.msra.mxu0 0.0
    %239 = vmatprep.subr.mxu0 0.0
    %240 = vmatpush1.msra.mxu0 0.0
    %241 = vmatprep.mubr.f32.mxu0 0.0
    %242 = vmatmul.mubr.f32.gmra.mrb[0].mxu0 %v104
    %v243 = vpop.f32.mrb[0].mxu0
    %v244 = vadd.f32 %v98, %v243
    %v245 = vpop.f32.mrb[0].mxu0
    %246 = vdwg.mxu0
    %v247 = vmax.f32 %v173, 0.0
    %v248 = vmax.f32 %v175, 0.0
    %v249 = vmax.f32 %v244, 0.0
    %v250 = vld [vmem:[%s3] sm:$0xff]
    %v251 = vld [vmem:[%s3 + $0x8] sm:$0xff]
    %v252 = vld [vmem:[%s3 + $0x10] sm:$0xff]
    %v253 = vld [vmem:[%s3 + $0x18] sm:$0xff]
    %v254 = vld [vmem:[%s3 + $0x20] sm:$0xff]
    %v255 = vld [vmem:[%s3 + $0x28] sm:$0xff]
    %v256 = vld [vmem:[%s3 + $0x30] sm:$0xff]
    %v257 = vld [vmem:[%s3 + $0x38] sm:$0xff]
    %v258 = vld [vmem:[%s3 + $0x40] sm:$0xff]
    %v259 = vld [vmem:[%s3 + $0x48] sm:$0xff]
    %v260 = vld [vmem:[%s3 + $0x50] sm:$0xff]
    %v261 = vld [vmem:[%s3 + $0x58] sm:$0xff]
    %v262 = vld [vmem:[%s3 + $0x60] sm:$0xff]
    %v263 = vld [vmem:[%s3 + $0x68] sm:$0xff]
    %v264 = vld [vmem:[%s3 + $0x70] sm:$0xff]
    %v265 = vld [vmem:[%s3 + $0x78] sm:$0xff]
    %v266 = vld [vmem:[%s3 + $0x80] sm:$0xff]
    %v267 = vld [vmem:[%s3 + $0x88] sm:$0xff]
    %v268 = vld [vmem:[%s3 + $0x90] sm:$0xff]
    %v269 = vld [vmem:[%s3 + $0x98] sm:$0xff]
    %v270 = vld [vmem:[%s3 + $0xa0] sm:$0xff]
    %v271 = vld [vmem:[%s3 + $0xa8] sm:$0xff]
    %v272 = vld [vmem:[%s3 + $0xb0] sm:$0xff]
    %v273 = vld [vmem:[%s3 + $0xb8] sm:$0xff]
    %v274 = vld [vmem:[%s3 + $0xc0] sm:$0xff]
    %v275 = vld [vmem:[%s3 + $0xc8] sm:$0xff]
    %v276 = vld [vmem:[%s3 + $0xd0] sm:$0xff]
    %v277 = vld [vmem:[%s3 + $0xd8] sm:$0xff]
    %v278 = vld [vmem:[%s3 + $0xe0] sm:$0xff]
    %v279 = vld [vmem:[%s3 + $0xe8] sm:$0xff]
    %v280 = vld [vmem:[%s3 + $0xf0] sm:$0xff]
    %v281 = vld [vmem:[%s3 + $0xf8] sm:$0xff]
    %v282 = vld [vmem:[%s3 + $0x100] sm:$0xff]
    %v283 = vld [vmem:[%s3 + $0x108] sm:$0xff]
    %v284 = vld [vmem:[%s3 + $0x110] sm:$0xff]
    %v285 = vld [vmem:[%s3 + $0x118] sm:$0xff]
    %v286 = vld [vmem:[%s3 + $0x120] sm:$0xff]
    %v287 = vld [vmem:[%s3 + $0x128] sm:$0xff]
    %v288 = vld [vmem:[%s3 + $0x130] sm:$0xff]
    %v289 = vld [vmem:[%s3 + $0x138] sm:$0xff]
    %v290 = vld [vmem:[%s3 + $0x140] sm:$0xff]
    %v291 = vld [vmem:[%s3 + $0x148] sm:$0xff]
    %v292 = vld [vmem:[%s3 + $0x150] sm:$0xff]
    %v293 = vld [vmem:[%s3 + $0x158] sm:$0xff]
    %v294 = vld [vmem:[%s3 + $0x160] sm:$0xff]
    %v295 = vld [vmem:[%s3 + $0x168] sm:$0xff]
    %v296 = vld [vmem:[%s3 + $0x170] sm:$0xff]
    %v297 = vld [vmem:[%s3 + $0x178] sm:$0xff]
    %v298 = vld [vmem:[%s3 + $0x180] sm:$0xff]
    %v299 = vld [vmem:[%s3 + $0x188] sm:$0xff]
    %v300 = vld [vmem:[%s3 + $0x190] sm:$0xff]
    %v301 = vld [vmem:[%s3 + $0x198] sm:$0xff]
    %v302 = vld [vmem:[%s3 + $0x1a0] sm:$0xff]
    %v303 = vld [vmem:[%s3 + $0x1a8] sm:$0xff]
    %v304 = vld [vmem:[%s3 + $0x1b0] sm:$0xff]
    %v305 = vld [vmem:[%s3 + $0x1b8] sm:$0xff]
    %v306 = vld [vmem:[%s3 + $0x1c0] sm:$0xff]
    %v307 = vld [vmem:[%s3 + $0x1c8] sm:$0xff]
    %v308 = vld [vmem:[%s3 + $0x1d0] sm:$0xff]
    %v309 = vld [vmem:[%s3 + $0x1d8] sm:$0xff]
    %v310 = vld [vmem:[%s3 + $0x1e0] sm:$0xff]
    %v311 = vld [vmem:[%s3 + $0x1e8] sm:$0xff]
    %v312 = vld [vmem:[%s3 + $0x1f0] sm:$0xff]
    %v313 = vld [vmem:[%s3 + $0x1f8] sm:$0xff]
    %v314 = vld [vmem:[%s3 + $0x200] sm:$0xff]
    %v315 = vld [vmem:[%s3 + $0x208] sm:$0xff]
    %v316 = vld [vmem:[%s3 + $0x210] sm:$0xff]
    %v317 = vld [vmem:[%s3 + $0x218] sm:$0xff]
    %v318 = vld [vmem:[%s3 + $0x220] sm:$0xff]
    %v319 = vld [vmem:[%s3 + $0x228] sm:$0xff]
    %v320 = vld [vmem:[%s3 + $0x230] sm:$0xff]
    %v321 = vld [vmem:[%s3 + $0x238] sm:$0xff]
    %v322 = vld [vmem:[%s3 + $0x240] sm:$0xff]
    %v323 = vld [vmem:[%s3 + $0x248] sm:$0xff]
    %v324 = vld [vmem:[%s3 + $0x250] sm:$0xff]
    %v325 = vld [vmem:[%s3 + $0x258] sm:$0xff]
    %v326 = vld [vmem:[%s3 + $0x260] sm:$0xff]
    %v327 = vld [vmem:[%s3 + $0x268] sm:$0xff]
    %v328 = vld [vmem:[%s3 + $0x270] sm:$0xff]
    %v329 = vld [vmem:[%s3 + $0x278] sm:$0xff]
    %v330 = vld [vmem:[%s4] sm:$0x3]
    %v332 = vlaneseq
    %v333 = vshrl.u32 %v332, 7
    %v334 = vsub.s32 0, %v333
    %v335 = vrot.slane %v330, %v334
    %v336 = vlaneseq
    %v337 = vshrl.u32 %v336, 7
    %v338 = vsub.s32 1, %v337
    %v339 = vrot.slane %v330, %v338
    %vm342 = vcmask 523264
    %v344 = vsel %vm342, %v249, 0
    %346 = vmatprep.subr.mxu0 %v251
    %347 = vmatpush1.msra.mxu0 %v250
    %348 = vmatprep.subr.mxu0 %v253
    %349 = vmatpush1.msra.mxu0 %v252
    %350 = vmatprep.subr.mxu0 %v255
    %351 = vmatpush1.msra.mxu0 %v254
    %352 = vmatprep.subr.mxu0 %v257
    %353 = vmatpush1.msra.mxu0 %v256
    %354 = vmatprep.subr.mxu0 %v259
    %355 = vmatpush1.msra.mxu0 %v258
    %356 = vmatprep.subr.mxu0 %v261
    %357 = vmatpush1.msra.mxu0 %v260
    %358 = vmatprep.subr.mxu0 %v263
    %359 = vmatpush1.msra.mxu0 %v262
    %360 = vmatprep.subr.mxu0 %v265
    %361 = vmatpush1.msra.mxu0 %v264
    %362 = vmatprep.subr.mxu0 %v267
    %363 = vmatpush1.msra.mxu0 %v266
    %364 = vmatprep.subr.mxu0 %v269
    %365 = vmatpush1.msra.mxu0 %v268
    %366 = vmatprep.subr.mxu0 %v271
    %367 = vmatpush1.msra.mxu0 %v270
    %368 = vmatprep.subr.mxu0 %v273
    %369 = vmatpush1.msra.mxu0 %v272
    %370 = vmatprep.subr.mxu0 %v275
    %371 = vmatpush1.msra.mxu0 %v274
    %372 = vmatprep.subr.mxu0 %v277
    %373 = vmatpush1.msra.mxu0 %v276
    %374 = vmatprep.subr.mxu0 %v279
    %375 = vmatpush1.msra.mxu0 %v278
    %376 = vmatprep.subr.mxu0 %v281
    %377 = vmatpush1.msra.mxu0 %v280
    %378 = vmatprep.subr.mxu0 %v283
    %379 = vmatpush1.msra.mxu0 %v282
    %380 = vmatprep.subr.mxu0 %v285
    %381 = vmatpush1.msra.mxu0 %v284
    %382 = vmatprep.subr.mxu0 %v287
    %383 = vmatpush1.msra.mxu0 %v286
    %384 = vmatprep.subr.mxu0 %v289
    %385 = vmatpush1.msra.mxu0 %v288
    %386 = vmatprep.subr.mxu0 %v291
    %387 = vmatpush1.msra.mxu0 %v290
    %388 = vmatprep.subr.mxu0 %v293
    %389 = vmatpush1.msra.mxu0 %v292
    %390 = vmatprep.subr.mxu0 %v295
    %391 = vmatpush1.msra.mxu0 %v294
    %392 = vmatprep.subr.mxu0 %v297
    %393 = vmatpush1.msra.mxu0 %v296
    %394 = vmatprep.subr.mxu0 %v299
    %395 = vmatpush1.msra.mxu0 %v298
    %396 = vmatprep.subr.mxu0 %v301
    %397 = vmatpush1.msra.mxu0 %v300
    %398 = vmatprep.subr.mxu0 %v303
    %399 = vmatpush1.msra.mxu0 %v302
    %400 = vmatprep.subr.mxu0 %v305
    %401 = vmatpush1.msra.mxu0 %v304
    %402 = vmatprep.subr.mxu0 %v307
    %403 = vmatpush1.msra.mxu0 %v306
    %404 = vmatprep.subr.mxu0 %v309
    %405 = vmatpush1.msra.mxu0 %v308
    %406 = vmatprep.subr.mxu0 %v311
    %407 = vmatpush1.msra.mxu0 %v310
    %408 = vmatprep.subr.mxu0 %v313
    %409 = vmatpush1.msra.mxu0 %v312
    %410 = vmatprep.mubr.f32.mxu0 %v248
    %411 = vmatmul.mubr.f32.gmra.mrb[0].mxu0 %v247
    %v412 = vpop.f32.mrb[0].mxu0
    %v413 = vadd.f32 %v335, %v412
    %v414 = vpop.f32.mrb[0].mxu0
    %v415 = vadd.f32 %v339, %v414
    %416 = vdwg.mxu0
    %417 = vmatprep.subr.mxu0 %v315
    %418 = vmatpush1.msra.mxu0 %v314
    %419 = vmatprep.subr.mxu0 %v317
    %420 = vmatpush1.msra.mxu0 %v316
    %421 = vmatprep.subr.mxu0 %v319
    %422 = vmatpush1.msra.mxu0 %v318
    %423 = vmatprep.subr.mxu0 %v321
    %424 = vmatpush1.msra.mxu0 %v320
    %425 = vmatprep.subr.mxu0 %v323
    %426 = vmatpush1.msra.mxu0 %v322
    %427 = vmatprep.subr.mxu0 %v325
    %428 = vmatpush1.msra.mxu0 %v324
    %429 = vmatprep.subr.mxu0 %v327
    %430 = vmatpush1.msra.mxu0 %v326
    %431 = vmatprep.subr.mxu0 %v329
    %432 = vmatpush1.msra.mxu0 %v328
    %433 = vmatprep.subr.mxu0 0.0
    %434 = vmatpush1.msra.mxu0 0.0
    %435 = vmatprep.subr.mxu0 0.0
    %436 = vmatpush1.msra.mxu0 0.0
    %437 = vmatprep.subr.mxu0 0.0
    %438 = vmatpush1.msra.mxu0 0.0
    %439 = vmatprep.subr.mxu0 0.0
    %440 = vmatpush1.msra.mxu0 0.0
    %441 = vmatprep.subr.mxu0 0.0
    %442 = vmatpush1.msra.mxu0 0.0
    %443 = vmatprep.subr.mxu0 0.0
    %444 = vmatpush1.msra.mxu0 0.0
    %445 = vmatprep.subr.mxu0 0.0
    %446 = vmatpush1.msra.mxu0 0.0
    %447 = vmatprep.subr.mxu0 0.0
    %448 = vmatpush1.msra.mxu0 0.0
    %449 = vmatprep.subr.mxu0 0.0
    %450 = vmatpush1.msra.mxu0 0.0
    %451 = vmatprep.subr.mxu0 0.0
    %452 = vmatpush1.msra.mxu0 0.0
    %453 = vmatprep.subr.mxu0 0.0
    %454 = vmatpush1.msra.mxu0 0.0
    %455 = vmatprep.subr.mxu0 0.0
    %456 = vmatpush1.msra.mxu0 0.0
    %457 = vmatprep.subr.mxu0 0.0
    %458 = vmatpush1.msra.mxu0 0.0
    %459 = vmatprep.subr.mxu0 0.0
    %460 = vmatpush1.msra.mxu0 0.0
    %461 = vmatprep.subr.mxu0 0.0
    %462 = vmatpush1.msra.mxu0 0.0
    %463 = vmatprep.subr.mxu0 0.0
    %464 = vmatpush1.msra.mxu0 0.0
    %465 = vmatprep.subr.mxu0 0.0
    %466 = vmatpush1.msra.mxu0 0.0
    %467 = vmatprep.subr.mxu0 0.0
    %468 = vmatpush1.msra.mxu0 0.0
    %469 = vmatprep.subr.mxu0 0.0
    %470 = vmatpush1.msra.mxu0 0.0
    %471 = vmatprep.subr.mxu0 0.0
    %472 = vmatpush1.msra.mxu0 0.0
    %473 = vmatprep.subr.mxu0 0.0
    %474 = vmatpush1.msra.mxu0 0.0
    %475 = vmatprep.subr.mxu0 0.0
    %476 = vmatpush1.msra.mxu0 0.0
    %477 = vmatprep.subr.mxu0 0.0
    %478 = vmatpush1.msra.mxu0 0.0
    %479 = vmatprep.subr.mxu0 0.0
    %480 = vmatpush1.msra.mxu0 0.0
    %481 = vmatprep.mubr.f32.mxu0 0.0
    %482 = vmatmul.mubr.f32.gmra.mrb[0].mxu0 %v344
    %v483 = vpop.f32.mrb[0].mxu0
    %v484 = vadd.f32 %v413, %v483
    %v485 = vpop.f32.mrb[0].mxu0
    %v486 = vadd.f32 %v415, %v485
    %487 = vdwg.mxu0
    %v488 = vmax.f32 %v484, 0.0
    %v489 = vmax.f32 %v486, 0.0
    %vm490 = vcmask 277632
    %v491 = vsel %vm490, %v486, -inf
    %492 = vmax.xlane.f32.xlu0 %v491
    %v493 = vpop.xlane.xlu0 %492
    %v494 = vsub.f32 %v486, %v493
    %v495 = vmul.f32 %v494, 1.442695
    %v496 = vpow.pop %v495
    %v497 = vld [vmem:[%s5] sm:$0xff]
    %v498 = vld [vmem:[%s5 + $0x8] sm:$0xff]
    %v499 = vld [vmem:[%s5 + $0x10] sm:$0x3]
    %501 = vrot.lane.b32.xlu0 %v496, 112
    %v502 = vpop.permute.xlu0 %501
    %vm503 = vcmask 146432
    %v504 = vsel %vm503, %v502, 0
    %vm506 = vcmask 1041408
    %v508 = vsel %vm506, %v499, 0
    %510 = vmatprep.subr.mxu0 0.0
    %511 = vmatpush1.msra.mxu0 %v497
    %512 = vmatprep.subr.mxu0 0.0
    %513 = vmatpush1.msra.mxu0 %v498
    %514 = vmatprep.subr.mxu0 0.0
    %515 = vmatpush1.msra.mxu0 %v508
    %516 = vmatprep.subr.mxu0 0.0
    %517 = vmatpush1.msra.mxu0 0.0
    %518 = vmatprep.subr.mxu0 0.0
    %519 = vmatpush1.msra.mxu0 0.0
    %520 = vmatprep.subr.mxu0 0.0
    %521 = vmatpush1.msra.mxu0 0.0
    %522 = vmatprep.subr.mxu0 0.0
    %523 = vmatpush1.msra.mxu0 0.0
    %524 = vmatprep.subr.mxu0 0.0
    %525 = vmatpush1.msra.mxu0 0.0
    %526 = vmatprep.subr.mxu0 0.0
    %527 = vmatpush1.msra.mxu0 0.0
    %528 = vmatprep.subr.mxu0 0.0
    %529 = vmatpush1.msra.mxu0 0.0
    %530 = vmatprep.subr.mxu0 0.0
    %531 = vmatpush1.msra.mxu0 0.0
    %532 = vmatprep.subr.mxu0 0.0
    %533 = vmatpush1.msra.mxu0 0.0
    %534 = vmatprep.subr.mxu0 0.0
    %535 = vmatpush1.msra.mxu0 0.0
    %536 = vmatprep.subr.mxu0 0.0
    %537 = vmatpush1.msra.mxu0 0.0
    %538 = vmatprep.subr.mxu0 0.0
    %539 = vmatpush1.msra.mxu0 0.0
    %540 = vmatprep.subr.mxu0 0.0
    %541 = vmatpush1.msra.mxu0 0.0
    %542 = vmatprep.subr.mxu0 0.0
    %543 = vmatpush1.msra.mxu0 0.0
    %544 = vmatprep.subr.mxu0 0.0
    %545 = vmatpush1.msra.mxu0 0.0
    %546 = vmatprep.subr.mxu0 0.0
    %547 = vmatpush1.msra.mxu0 0.0
    %548 = vmatprep.subr.mxu0 0.0
    %549 = vmatpush1.msra.mxu0 0.0
    %550 = vmatprep.subr.mxu0 0.0
    %551 = vmatpush1.msra.mxu0 0.0
    %552 = vmatprep.subr.mxu0 0.0
    %553 = vmatpush1.msra.mxu0 0.0
    %554 = vmatprep.subr.mxu0 0.0
    %555 = vmatpush1.msra.mxu0 0.0
    %556 = vmatprep.subr.mxu0 0.0
    %557 = vmatpush1.msra.mxu0 0.0
    %558 = vmatprep.subr.mxu0 0.0
    %559 = vmatpush1.msra.mxu0 0.0
    %560 = vmatprep.subr.mxu0 0.0
    %561 = vmatpush1.msra.mxu0 0.0
    %562 = vmatprep.subr.mxu0 0.0
    %563 = vmatpush1.msra.mxu0 0.0
    %564 = vmatprep.subr.mxu0 0.0
    %565 = vmatpush1.msra.mxu0 0.0
    %566 = vmatprep.subr.mxu0 0.0
    %567 = vmatpush1.msra.mxu0 0.0
    %568 = vmatprep.subr.mxu0 0.0
    %569 = vmatpush1.msra.mxu0 0.0
    %570 = vmatprep.subr.mxu0 0.0
    %571 = vmatpush1.msra.mxu0 0.0
    %572 = vmatprep.subr.mxu0 0.0
    %573 = vmatpush1.msra.mxu0 0.0
    %574 = vmatprep.mubr.f32.mxu0 0.0
    %575 = vmatmul.mubr.f32.gmra.mrb[0].mxu0 %v504
    %v576 = vpop.f32.mrb[0].mxu0
    %v577 = vadd.f32 0.0, %v576
    %v578 = vpop.f32.mrb[0].mxu0
    %579 = vdwg.mxu0
    %v580 = vrcp.pop %v577
    %v581 = vld [vmem:[%s6] sm:$0xff]
    %v582 = vld [vmem:[%s6 + $0x8] sm:$0xff]
    %v583 = vld [vmem:[%s6 + $0x10] sm:$0xff]
    %v584 = vld [vmem:[%s6 + $0x18] sm:$0xff]
    %v585 = vld [vmem:[%s6 + $0x20] sm:$0xff]
    %v586 = vld [vmem:[%s6 + $0x28] sm:$0xff]
    %v587 = vld [vmem:[%s6 + $0x30] sm:$0x3]
    %v588 = vld [vmem:[%s6 + $0x38] sm:$0x3]
    %v589 = vld [vmem:[%s6 + $0x40] sm:$0x3]
    %v591 = vsel %vm506, %v587, 0
    %v594 = vsel %vm506, %v588, 0
    %v597 = vsel %vm506, %v589, 0
    %599 = vmatprep.subr.mxu0 %v582
    %600 = vmatpush1.msra.mxu0 %v581
    %601 = vmatprep.subr.mxu0 %v585
    %602 = vmatpush1.msra.mxu0 %v584
    %603 = vmatprep.subr.mxu0 %v594
    %604 = vmatpush1.msra.mxu0 %v591
    %605 = vmatprep.subr.mxu0 0.0
    %606 = vmatpush1.msra.mxu0 0.0
    %607 = vmatprep.subr.mxu0 0.0
    %608 = vmatpush1.msra.mxu0 0.0
    %609 = vmatprep.subr.mxu0 0.0
    %610 = vmatpush1.msra.mxu0 0.0
    %611 = vmatprep.subr.mxu0 0.0
    %612 = vmatpush1.msra.mxu0 0.0
    %613 = vmatprep.subr.mxu0 0.0
    %614 = vmatpush1.msra.mxu0 0.0
    %615 = vmatprep.subr.mxu0 0.0
    %616 = vmatpush1.msra.mxu0 0.0
    %617 = vmatprep.subr.mxu0 0.0
    %618 = vmatpush1.msra.mxu0 0.0
    %619 = vmatprep.subr.mxu0 0.0
    %620 = vmatpush1.msra.mxu0 0.0
    %621 = vmatprep.subr.mxu0 0.0
    %622 = vmatpush1.msra.mxu0 0.0
    %623 = vmatprep.subr.mxu0 0.0
    %624 = vmatpush1.msra.mxu0 0.0
    %625 = vmatprep.subr.mxu0 0.0
    %626 = vmatpush1.msra.mxu0 0.0
    %627 = vmatprep.subr.mxu0 0.0
    %628 = vmatpush1.msra.mxu0 0.0
    %629 = vmatprep.subr.mxu0 0.0
    %630 = vmatpush1.msra.mxu0 0.0
    %631 = vmatprep.subr.mxu0 0.0
    %632 = vmatpush1.msra.mxu0 0.0
    %633 = vmatprep.subr.mxu0 0.0
    %634 = vmatpush1.msra.mxu0 0.0
    %635 = vmatprep.subr.mxu0 0.0
    %636 = vmatpush1.msra.mxu0 0.0
    %637 = vmatprep.subr.mxu0 0.0
    %638 = vmatpush1.msra.mxu0 0.0
    %639 = vmatprep.subr.mxu0 0.0
    %640 = vmatpush1.msra.mxu0 0.0
    %641 = vmatprep.subr.mxu0 0.0
    %642 = vmatpush1.msra.mxu0 0.0
    %643 = vmatprep.subr.mxu0 0.0
    %644 = vmatpush1.msra.mxu0 0.0
    %645 = vmatprep.subr.mxu0 0.0
    %646 = vmatpush1.msra.mxu0 0.0
    %647 = vmatprep.subr.mxu0 0.0
    %648 = vmatpush1.msra.mxu0 0.0
    %649 = vmatprep.subr.mxu0 0.0
    %650 = vmatpush1.msra.mxu0 0.0
    %651 = vmatprep.subr.mxu0 0.0
    %652 = vmatpush1.msra.mxu0 0.0
    %653 = vmatprep.subr.mxu0 0.0
    %654 = vmatpush1.msra.mxu0 0.0
    %655 = vmatprep.subr.mxu0 0.0
    %656 = vmatpush1.msra.mxu0 0.0
    %657 = vmatprep.subr.mxu0 0.0
    %658 = vmatpush1.msra.mxu0 0.0
    %659 = vmatprep.subr.mxu0 0.0
    %660 = vmatpush1.msra.mxu0 0.0
    %661 = vmatprep.subr.mxu0 0.0
    %662 = vmatpush1.msra.mxu0 0.0
    %663 = vmatprep.mubr.f32.mxu0 0.0
    %664 = vmatmul.mubr.f32.gmra.mrb[0].mxu0 %v504
    %v665 = vpop.f32.mrb[0].mxu0
    %v666 = vadd.f32 0.0, %v665
    %v667 = vpop.f32.mrb[0].mxu0
    %v668 = vadd.f32 0.0, %v667
    %669 = vdwg.mxu0
    %670 = vmatprep.subr.mxu0 0.0
    %671 = vmatpush1.msra.mxu0 %v583
    %672 = vmatprep.subr.mxu0 0.0
    %673 = vmatpush1.msra.mxu0 %v586
    %674 = vmatprep.subr.mxu0 0.0
    %675 = vmatpush1.msra.mxu0 %v597
    %676 = vmatprep.subr.mxu0 0.0
    %677 = vmatpush1.msra.mxu0 0.0
    %678 = vmatprep.subr.mxu0 0.0
    %679 = vmatpush1.msra.mxu0 0.0
    %680 = vmatprep.subr.mxu0 0.0
    %681 = vmatpush1.msra.mxu0 0.0
    %682 = vmatprep.subr.mxu0 0.0
    %683 = vmatpush1.msra.mxu0 0.0
    %684 = vmatprep.subr.mxu0 0.0
    %685 = vmatpush1.msra.mxu0 0.0
    %686 = vmatprep.subr.mxu0 0.0
    %687 = vmatpush1.msra.mxu0 0.0
    %688 = vmatprep.subr.mxu0 0.0
    %689 = vmatpush1.msra.mxu0 0.0
    %690 = vmatprep.subr.mxu0 0.0
    %691 = vmatpush1.msra.mxu0 0.0
    %692 = vmatprep.subr.mxu0 0.0
    %693 = vmatpush1.msra.mxu0 0.0
    %694 = vmatprep.subr.mxu0 0.0
    %695 = vmatpush1.msra.mxu0 0.0
    %696 = vmatprep.subr.mxu0 0.0
    %697 = vmatpush1.msra.mxu0 0.0
    %698 = vmatprep.subr.mxu0 0.0
    %699 = vmatpush1.msra.mxu0 0.0
    %700 = vmatprep.subr.mxu0 0.0
    %701 = vmatpush1.msra.mxu0 0.0
    %702 = vmatprep.subr.mxu0 0.0
    %703 = vmatpush1.msra.mxu0 0.0
    %704 = vmatprep.subr.mxu0 0.0
    %705 = vmatpush1.msra.mxu0 0.0
    %706 = vmatprep.subr.mxu0 0.0
    %707 = vmatpush1.msra.mxu0 0.0
    %708 = vmatprep.subr.mxu0 0.0
    %709 = vmatpush1.msra.mxu0 0.0
    %710 = vmatprep.subr.mxu0 0.0
    %711 = vmatpush1.msra.mxu0 0.0
    %712 = vmatprep.subr.mxu0 0.0
    %713 = vmatpush1.msra.mxu0 0.0
    %714 = vmatprep.subr.mxu0 0.0
    %715 = vmatpush1.msra.mxu0 0.0
    %716 = vmatprep.subr.mxu0 0.0
    %717 = vmatpush1.msra.mxu0 0.0
    %718 = vmatprep.subr.mxu0 0.0
    %719 = vmatpush1.msra.mxu0 0.0
    %720 = vmatprep.subr.mxu0 0.0
    %721 = vmatpush1.msra.mxu0 0.0
    %722 = vmatprep.subr.mxu0 0.0
    %723 = vmatpush1.msra.mxu0 0.0
    %724 = vmatprep.subr.mxu0 0.0
    %725 = vmatpush1.msra.mxu0 0.0
    %726 = vmatprep.subr.mxu0 0.0
    %727 = vmatpush1.msra.mxu0 0.0
    %728 = vmatprep.subr.mxu0 0.0
    %729 = vmatpush1.msra.mxu0 0.0
    %730 = vmatprep.subr.mxu0 0.0
    %731 = vmatpush1.msra.mxu0 0.0
    %732 = vmatprep.subr.mxu0 0.0
    %733 = vmatpush1.msra.mxu0 0.0
    %734 = vmatprep.mubr.f32.mxu0 0.0
    %735 = vmatmul.mubr.f32.gmra.mrb[0].mxu0 %v504
    %v736 = vpop.f32.mrb[0].mxu0
    %v737 = vadd.f32 0.0, %v736
    %v738 = vpop.f32.mrb[0].mxu0
    %739 = vdwg.mxu0
    %v740 = vld [vmem:[%s7] sm:$0xff]
    %v741 = vld [vmem:[%s7 + $0x8] sm:$0xff]
    %v742 = vld [vmem:[%s7 + $0x10] sm:$0xff]
    %v743 = vld [vmem:[%s7 + $0x18] sm:$0xff]
    %v744 = vld [vmem:[%s7 + $0x20] sm:$0xff]
    %v745 = vld [vmem:[%s7 + $0x28] sm:$0xff]
    %v746 = vld [vmem:[%s7 + $0x30] sm:$0xff]
    %v747 = vld [vmem:[%s7 + $0x38] sm:$0xff]
    %v748 = vld [vmem:[%s7 + $0x40] sm:$0xff]
    %v749 = vld [vmem:[%s7 + $0x48] sm:$0xff]
    %v750 = vld [vmem:[%s7 + $0x50] sm:$0xff]
    %v751 = vld [vmem:[%s7 + $0x58] sm:$0xff]
    %v752 = vld [vmem:[%s7 + $0x60] sm:$0xff]
    %v753 = vld [vmem:[%s7 + $0x68] sm:$0xff]
    %v754 = vld [vmem:[%s7 + $0x70] sm:$0xff]
    %v755 = vld [vmem:[%s7 + $0x78] sm:$0xff]
    %v756 = vld [vmem:[%s7 + $0x80] sm:$0xff]
    %v757 = vld [vmem:[%s7 + $0x88] sm:$0xff]
    %v758 = vld [vmem:[%s7 + $0x90] sm:$0xff]
    %v759 = vld [vmem:[%s7 + $0x98] sm:$0xff]
    %v760 = vld [vmem:[%s7 + $0xa0] sm:$0xff]
    %v761 = vld [vmem:[%s7 + $0xa8] sm:$0xff]
    %v762 = vld [vmem:[%s7 + $0xb0] sm:$0xff]
    %v763 = vld [vmem:[%s7 + $0xb8] sm:$0xff]
    %v764 = vld [vmem:[%s7 + $0xc0] sm:$0xff]
    %v765 = vld [vmem:[%s7 + $0xc8] sm:$0xff]
    %v766 = vld [vmem:[%s7 + $0xd0] sm:$0xff]
    %v767 = vld [vmem:[%s7 + $0xd8] sm:$0xff]
    %v768 = vld [vmem:[%s7 + $0xe0] sm:$0xff]
    %v769 = vld [vmem:[%s7 + $0xe8] sm:$0xff]
    %v770 = vld [vmem:[%s7 + $0xf0] sm:$0xff]
    %v771 = vld [vmem:[%s7 + $0xf8] sm:$0xff]
    %v772 = vld [vmem:[%s7 + $0x100] sm:$0xff]
    %v773 = vld [vmem:[%s7 + $0x108] sm:$0xff]
    %v774 = vld [vmem:[%s7 + $0x110] sm:$0xff]
    %v775 = vld [vmem:[%s7 + $0x118] sm:$0xff]
    %v776 = vld [vmem:[%s7 + $0x120] sm:$0xff]
    %v777 = vld [vmem:[%s7 + $0x128] sm:$0xff]
    %v778 = vld [vmem:[%s7 + $0x130] sm:$0xff]
    %v779 = vld [vmem:[%s7 + $0x138] sm:$0xff]
    %v780 = vld [vmem:[%s7 + $0x140] sm:$0xff]
    %v781 = vld [vmem:[%s7 + $0x148] sm:$0xff]
    %v782 = vld [vmem:[%s7 + $0x150] sm:$0xff]
    %v783 = vld [vmem:[%s7 + $0x158] sm:$0xff]
    %v784 = vld [vmem:[%s7 + $0x160] sm:$0xff]
    %v785 = vld [vmem:[%s7 + $0x168] sm:$0xff]
    %v786 = vld [vmem:[%s7 + $0x170] sm:$0xff]
    %v787 = vld [vmem:[%s7 + $0x178] sm:$0xff]
    %v788 = vld [vmem:[%s7 + $0x180] sm:$0xff]
    %v789 = vld [vmem:[%s7 + $0x188] sm:$0xff]
    %v790 = vld [vmem:[%s7 + $0x190] sm:$0xff]
    %v791 = vld [vmem:[%s7 + $0x198] sm:$0xff]
    %v792 = vld [vmem:[%s7 + $0x1a0] sm:$0xff]
    %v793 = vld [vmem:[%s7 + $0x1a8] sm:$0xff]
    %vm794 = vcmask 130048
    %v796 = vsel %vm794, %v489, 0
    %798 = vmatprep.subr.mxu0 %v741
    %799 = vmatpush1.msra.mxu0 %v740
    %800 = vmatprep.subr.mxu0 %v744
    %801 = vmatpush1.msra.mxu0 %v743
    %802 = vmatprep.subr.mxu0 %v747
    %803 = vmatpush1.msra.mxu0 %v746
    %804 = vmatprep.subr.mxu0 %v750
    %805 = vmatpush1.msra.mxu0 %v749
    %806 = vmatprep.subr.mxu0 %v753
    %807 = vmatpush1.msra.mxu0 %v752
    %808 = vmatprep.subr.mxu0 %v756
    %809 = vmatpush1.msra.mxu0 %v755
    %810 = vmatprep.subr.mxu0 %v759
    %811 = vmatpush1.msra.mxu0 %v758
    %812 = vmatprep.subr.mxu0 %v762
    %813 = vmatpush1.msra.mxu0 %v761
    %814 = vmatprep.subr.mxu0 %v765
    %815 = vmatpush1.msra.mxu0 %v764
    %816 = vmatprep.subr.mxu0 %v768
    %817 = vmatpush1.msra.mxu0 %v767
    %818 = vmatprep.subr.mxu0 %v771
    %819 = vmatpush1.msra.mxu0 %v770
    %820 = vmatprep.subr.mxu0 %v774
    %821 = vmatpush1.msra.mxu0 %v773
    %822 = vmatprep.subr.mxu0 %v777
    %823 = vmatpush1.msra.mxu0 %v776
    %824 = vmatprep.subr.mxu0 %v780
    %825 = vmatpush1.msra.mxu0 %v779
    %826 = vmatprep.subr.mxu0 %v783
    %827 = vmatpush1.msra.mxu0 %v782
    %828 = vmatprep.subr.mxu0 %v786
    %829 = vmatpush1.msra.mxu0 %v785
    %830 = vmatprep.subr.mxu0 %v789
    %831 = vmatpush1.msra.mxu0 %v788
    %832 = vmatprep.subr.mxu0 %v792
    %833 = vmatpush1.msra.mxu0 %v791
    %834 = vmatprep.subr.mxu0 0.0
    %835 = vmatpush1.msra.mxu0 0.0
    %836 = vmatprep.subr.mxu0 0.0
    %837 = vmatpush1.msra.mxu0 0.0
    %838 = vmatprep.subr.mxu0 0.0
    %839 = vmatpush1.msra.mxu0 0.0
    %840 = vmatprep.subr.mxu0 0.0
    %841 = vmatpush1.msra.mxu0 0.0
    %842 = vmatprep.subr.mxu0 0.0
    %843 = vmatpush1.msra.mxu0 0.0
    %844 = vmatprep.subr.mxu0 0.0
    %845 = vmatpush1.msra.mxu0 0.0
    %846 = vmatprep.subr.mxu0 0.0
    %847 = vmatpush1.msra.mxu0 0.0
    %848 = vmatprep.subr.mxu0 0.0
    %849 = vmatpush1.msra.mxu0 0.0
    %850 = vmatprep.subr.mxu0 0.0
    %851 = vmatpush1.msra.mxu0 0.0
    %852 = vmatprep.subr.mxu0 0.0
    %853 = vmatpush1.msra.mxu0 0.0
    %854 = vmatprep.subr.mxu0 0.0
    %855 = vmatpush1.msra.mxu0 0.0
    %856 = vmatprep.subr.mxu0 0.0
    %857 = vmatpush1.msra.mxu0 0.0
    %858 = vmatprep.subr.mxu0 0.0
    %859 = vmatpush1.msra.mxu0 0.0
    %860 = vmatprep.subr.mxu0 0.0
    %861 = vmatpush1.msra.mxu0 0.0
    %862 = vmatprep.mubr.f32.mxu0 %v796
    %863 = vmatmul.mubr.f32.gmra.mrb[0].mxu0 %v488
    %v864 = vpop.f32.mrb[0].mxu0
    %v865 = vadd.f32 0.0, %v864
    %v866 = vpop.f32.mrb[0].mxu0
    %v867 = vadd.f32 0.0, %v866
    %868 = vdwg.mxu0
    %869 = vmatprep.subr.mxu0 0.0
    %870 = vmatpush1.msra.mxu0 %v742
    %871 = vmatprep.subr.mxu0 0.0
    %872 = vmatpush1.msra.mxu0 %v745
    %873 = vmatprep.subr.mxu0 0.0
    %874 = vmatpush1.msra.mxu0 %v748
    %875 = vmatprep.subr.mxu0 0.0
    %876 = vmatpush1.msra.mxu0 %v751
    %877 = vmatprep.subr.mxu0 0.0
    %878 = vmatpush1.msra.mxu0 %v754
    %879 = vmatprep.subr.mxu0 0.0
    %880 = vmatpush1.msra.mxu0 %v757
    %881 = vmatprep.subr.mxu0 0.0
    %882 = vmatpush1.msra.mxu0 %v760
    %883 = vmatprep.subr.mxu0 0.0
    %884 = vmatpush1.msra.mxu0 %v763
    %885 = vmatprep.subr.mxu0 0.0
    %886 = vmatpush1.msra.mxu0 %v766
    %887 = vmatprep.subr.mxu0 0.0
    %888 = vmatpush1.msra.mxu0 %v769
    %889 = vmatprep.subr.mxu0 0.0
    %890 = vmatpush1.msra.mxu0 %v772
    %891 = vmatprep.subr.mxu0 0.0
    %892 = vmatpush1.msra.mxu0 %v775
    %893 = vmatprep.subr.mxu0 0.0
    %894 = vmatpush1.msra.mxu0 %v778
    %895 = vmatprep.subr.mxu0 0.0
    %896 = vmatpush1.msra.mxu0 %v781
    %897 = vmatprep.subr.mxu0 0.0
    %898 = vmatpush1.msra.mxu0 %v784
    %899 = vmatprep.subr.mxu0 0.0
    %900 = vmatpush1.msra.mxu0 %v787
    %901 = vmatprep.subr.mxu0 0.0
    %902 = vmatpush1.msra.mxu0 %v790
    %903 = vmatprep.subr.mxu0 0.0
    %904 = vmatpush1.msra.mxu0 %v793
    %905 = vmatprep.subr.mxu0 0.0
    %906 = vmatpush1.msra.mxu0 0.0
    %907 = vmatprep.subr.mxu0 0.0
    %908 = vmatpush1.msra.mxu0 0.0
    %909 = vmatprep.subr.mxu0 0.0
    %910 = vmatpush1.msra.mxu0 0.0
    %911 = vmatprep.subr.mxu0 0.0
    %912 = vmatpush1.msra.mxu0 0.0
    %913 = vmatprep.subr.mxu0 0.0
    %914 = vmatpush1.msra.mxu0 0.0
    %915 = vmatprep.subr.mxu0 0.0
    %916 = vmatpush1.msra.mxu0 0.0
    %917 = vmatprep.subr.mxu0 0.0
    %918 = vmatpush1.msra.mxu0 0.0
    %919 = vmatprep.subr.mxu0 0.0
    %920 = vmatpush1.msra.mxu0 0.0
    %921 = vmatprep.subr.mxu0 0.0
    %922 = vmatpush1.msra.mxu0 0.0
    %923 = vmatprep.subr.mxu0 0.0
    %924 = vmatpush1.msra.mxu0 0.0
    %925 = vmatprep.subr.mxu0 0.0
    %926 = vmatpush1.msra.mxu0 0.0
    %927 = vmatprep.subr.mxu0 0.0
    %928 = vmatpush1.msra.mxu0 0.0
    %929 = vmatprep.subr.mxu0 0.0
    %930 = vmatpush1.msra.mxu0 0.0
    %931 = vmatprep.subr.mxu0 0.0
    %932 = vmatpush1.msra.mxu0 0.0
    %933 = vmatprep.mubr.f32.mxu0 %v796
    %934 = vmatmul.mubr.f32.gmra.mrb[0].mxu0 %v488
    %v935 = vpop.f32.mrb[0].mxu0
    %v936 = vadd.f32 0.0, %v935
    %v937 = vpop.f32.mrb[0].mxu0
    %938 = vdwg.mxu0
    %v939 = vmul.f32 %v666, %v865
    %v940 = vmul.f32 %v668, %v867
    %v941 = vmul.f32 %v737, %v936
    %v942 = vld [vmem:[%s8] sm:$0xff]
    %v943 = vld [vmem:[%s8 + $0x8] sm:$0xff]
    %v944 = vld [vmem:[%s8 + $0x10] sm:$0xff]
    %v945 = vld [vmem:[%s8 + $0x18] sm:$0xff]
    %v946 = vld [vmem:[%s8 + $0x20] sm:$0xff]
    %v947 = vld [vmem:[%s8 + $0x28] sm:$0xff]
    %v948 = vld [vmem:[%s8 + $0x30] sm:$0xff]
    %v949 = vld [vmem:[%s8 + $0x38] sm:$0xff]
    %v950 = vld [vmem:[%s8 + $0x40] sm:$0xff]
    %v951 = vld [vmem:[%s8 + $0x48] sm:$0xff]
    %v952 = vld [vmem:[%s8 + $0x50] sm:$0xff]
    %v953 = vld [vmem:[%s8 + $0x58] sm:$0xff]
    %v954 = vld [vmem:[%s8 + $0x60] sm:$0xff]
    %v955 = vld [vmem:[%s8 + $0x68] sm:$0xff]
    %v956 = vld [vmem:[%s8 + $0x70] sm:$0xff]
    %v957 = vld [vmem:[%s8 + $0x78] sm:$0xff]
    %v958 = vld [vmem:[%s8 + $0x80] sm:$0xff]
    %v959 = vld [vmem:[%s8 + $0x88] sm:$0xff]
    %v960 = vld [vmem:[%s8 + $0x90] sm:$0xff]
    %v961 = vld [vmem:[%s8 + $0x98] sm:$0xff]
    %v962 = vld [vmem:[%s8 + $0xa0] sm:$0xff]
    %v963 = vld [vmem:[%s8 + $0xa8] sm:$0xff]
    %v964 = vld [vmem:[%s8 + $0xb0] sm:$0xff]
    %v965 = vld [vmem:[%s8 + $0xb8] sm:$0xff]
    %v966 = vld [vmem:[%s8 + $0xc0] sm:$0xff]
    %v967 = vld [vmem:[%s8 + $0xc8] sm:$0xff]
    %v968 = vld [vmem:[%s8 + $0xd0] sm:$0xff]
    %v969 = vld [vmem:[%s8 + $0xd8] sm:$0xff]
    %v970 = vld [vmem:[%s8 + $0xe0] sm:$0xff]
    %v971 = vld [vmem:[%s8 + $0xe8] sm:$0xff]
    %v972 = vld [vmem:[%s8 + $0xf0] sm:$0xff]
    %v973 = vld [vmem:[%s8 + $0xf8] sm:$0xff]
    %v974 = vld [vmem:[%s8 + $0x100] sm:$0xff]
    %v975 = vld [vmem:[%s8 + $0x108] sm:$0xff]
    %v976 = vld [vmem:[%s8 + $0x110] sm:$0xff]
    %v977 = vld [vmem:[%s8 + $0x118] sm:$0xff]
    %vm978 = vcmask 261120
    %v980 = vsel %vm978, %v941, 0
    %982 = vmatprep.subr.mxu0 0.0
    %983 = vmatpush1.msra.mxu0 %v942
    %984 = vmatprep.subr.mxu0 0.0
    %985 = vmatpush1.msra.mxu0 %v943
    %986 = vmatprep.subr.mxu0 0.0
    %987 = vmatpush1.msra.mxu0 %v944
    %988 = vmatprep.subr.mxu0 0.0
    %989 = vmatpush1.msra.mxu0 %v945
    %990 = vmatprep.subr.mxu0 0.0
    %991 = vmatpush1.msra.mxu0 %v946
    %992 = vmatprep.subr.mxu0 0.0
    %993 = vmatpush1.msra.mxu0 %v947
    %994 = vmatprep.subr.mxu0 0.0
    %995 = vmatpush1.msra.mxu0 %v948
    %996 = vmatprep.subr.mxu0 0.0
    %997 = vmatpush1.msra.mxu0 %v949
    %998 = vmatprep.subr.mxu0 0.0
    %999 = vmatpush1.msra.mxu0 %v950
    %1000 = vmatprep.subr.mxu0 0.0
    %1001 = vmatpush1.msra.mxu0 %v951
    %1002 = vmatprep.subr.mxu0 0.0
    %1003 = vmatpush1.msra.mxu0 %v952
    %1004 = vmatprep.subr.mxu0 0.0
    %1005 = vmatpush1.msra.mxu0 %v953
    %1006 = vmatprep.subr.mxu0 0.0
    %1007 = vmatpush1.msra.mxu0 %v954
    %1008 = vmatprep.subr.mxu0 0.0
    %1009 = vmatpush1.msra.mxu0 %v955
    %1010 = vmatprep.subr.mxu0 0.0
    %1011 = vmatpush1.msra.mxu0 %v956
    %1012 = vmatprep.subr.mxu0 0.0
    %1013 = vmatpush1.msra.mxu0 %v957
    %1014 = vmatprep.subr.mxu0 0.0
    %1015 = vmatpush1.msra.mxu0 %v958
    %1016 = vmatprep.subr.mxu0 0.0
    %1017 = vmatpush1.msra.mxu0 %v959
    %1018 = vmatprep.subr.mxu0 0.0
    %1019 = vmatpush1.msra.mxu0 %v960
    %1020 = vmatprep.subr.mxu0 0.0
    %1021 = vmatpush1.msra.mxu0 %v961
    %1022 = vmatprep.subr.mxu0 0.0
    %1023 = vmatpush1.msra.mxu0 %v962
    %1024 = vmatprep.subr.mxu0 0.0
    %1025 = vmatpush1.msra.mxu0 %v963
    %1026 = vmatprep.subr.mxu0 0.0
    %1027 = vmatpush1.msra.mxu0 %v964
    %1028 = vmatprep.subr.mxu0 0.0
    %1029 = vmatpush1.msra.mxu0 %v965
    %1030 = vmatprep.subr.mxu0 0.0
    %1031 = vmatpush1.msra.mxu0 %v966
    %1032 = vmatprep.subr.mxu0 0.0
    %1033 = vmatpush1.msra.mxu0 %v967
    %1034 = vmatprep.subr.mxu0 0.0
    %1035 = vmatpush1.msra.mxu0 %v968
    %1036 = vmatprep.subr.mxu0 0.0
    %1037 = vmatpush1.msra.mxu0 %v969
    %1038 = vmatprep.subr.mxu0 0.0
    %1039 = vmatpush1.msra.mxu0 %v970
    %1040 = vmatprep.subr.mxu0 0.0
    %1041 = vmatpush1.msra.mxu0 %v971
    %1042 = vmatprep.subr.mxu0 0.0
    %1043 = vmatpush1.msra.mxu0 %v972
    %1044 = vmatprep.subr.mxu0 0.0
    %1045 = vmatpush1.msra.mxu0 %v973
    %1046 = vmatprep.mubr.f32.mxu0 %v940
    %1047 = vmatmul.mubr.f32.gmra.mrb[0].mxu0 %v939
    %v1048 = vpop.f32.mrb[0].mxu0
    %v1049 = vadd.f32 0.0, %v1048
    %v1050 = vpop.f32.mrb[0].mxu0
    %1051 = vdwg.mxu0
    %1052 = vmatprep.subr.mxu0 0.0
    %1053 = vmatpush1.msra.mxu0 %v974
    %1054 = vmatprep.subr.mxu0 0.0
    %1055 = vmatpush1.msra.mxu0 %v975
    %1056 = vmatprep.subr.mxu0 0.0
    %1057 = vmatpush1.msra.mxu0 %v976
    %1058 = vmatprep.subr.mxu0 0.0
    %1059 = vmatpush1.msra.mxu0 %v977
    %1060 = vmatprep.subr.mxu0 0.0
    %1061 = vmatpush1.msra.mxu0 0.0
    %1062 = vmatprep.subr.mxu0 0.0
    %1063 = vmatpush1.msra.mxu0 0.0
    %1064 = vmatprep.subr.mxu0 0.0
    %1065 = vmatpush1.msra.mxu0 0.0
    %1066 = vmatprep.subr.mxu0 0.0
    %1067 = vmatpush1.msra.mxu0 0.0
    %1068 = vmatprep.subr.mxu0 0.0
    %1069 = vmatpush1.msra.mxu0 0.0
    %1070 = vmatprep.subr.mxu0 0.0
    %1071 = vmatpush1.msra.mxu0 0.0
    %1072 = vmatprep.subr.mxu0 0.0
    %1073 = vmatpush1.msra.mxu0 0.0
    %1074 = vmatprep.subr.mxu0 0.0
    %1075 = vmatpush1.msra.mxu0 0.0
    %1076 = vmatprep.subr.mxu0 0.0
    %1077 = vmatpush1.msra.mxu0 0.0
    %1078 = vmatprep.subr.mxu0 0.0
    %1079 = vmatpush1.msra.mxu0 0.0
    %1080 = vmatprep.subr.mxu0 0.0
    %1081 = vmatpush1.msra.mxu0 0.0
    %1082 = vmatprep.subr.mxu0 0.0
    %1083 = vmatpush1.msra.mxu0 0.0
    %1084 = vmatprep.subr.mxu0 0.0
    %1085 = vmatpush1.msra.mxu0 0.0
    %1086 = vmatprep.subr.mxu0 0.0
    %1087 = vmatpush1.msra.mxu0 0.0
    %1088 = vmatprep.subr.mxu0 0.0
    %1089 = vmatpush1.msra.mxu0 0.0
    %1090 = vmatprep.subr.mxu0 0.0
    %1091 = vmatpush1.msra.mxu0 0.0
    %1092 = vmatprep.subr.mxu0 0.0
    %1093 = vmatpush1.msra.mxu0 0.0
    %1094 = vmatprep.subr.mxu0 0.0
    %1095 = vmatpush1.msra.mxu0 0.0
    %1096 = vmatprep.subr.mxu0 0.0
    %1097 = vmatpush1.msra.mxu0 0.0
    %1098 = vmatprep.subr.mxu0 0.0
    %1099 = vmatpush1.msra.mxu0 0.0
    %1100 = vmatprep.subr.mxu0 0.0
    %1101 = vmatpush1.msra.mxu0 0.0
    %1102 = vmatprep.subr.mxu0 0.0
    %1103 = vmatpush1.msra.mxu0 0.0
    %1104 = vmatprep.subr.mxu0 0.0
    %1105 = vmatpush1.msra.mxu0 0.0
    %1106 = vmatprep.subr.mxu0 0.0
    %1107 = vmatpush1.msra.mxu0 0.0
    %1108 = vmatprep.subr.mxu0 0.0
    %1109 = vmatpush1.msra.mxu0 0.0
    %1110 = vmatprep.subr.mxu0 0.0
    %1111 = vmatpush1.msra.mxu0 0.0
    %1112 = vmatprep.subr.mxu0 0.0
    %1113 = vmatpush1.msra.mxu0 0.0
    %1114 = vmatprep.subr.mxu0 0.0
    %1115 = vmatpush1.msra.mxu0 0.0
    %1116 = vmatprep.mubr.f32.mxu0 0.0
    %1117 = vmatmul.mubr.f32.gmra.mrb[0].mxu0 %v980
    %v1118 = vpop.f32.mrb[0].mxu0
    %v1119 = vadd.f32 %v1049, %v1118
    %v1120 = vpop.f32.mrb[0].mxu0
    %1121 = vdwg.mxu0
    %v1122 = vld [vmem:[%s9] sm:$0x3]
    %vm1123 = vcmask 15360
    %v1125 = vsel %vm1123, %v580, 0
    %v1128 = vsel %vm506, %v1122, 0
    %1130 = vmatprep.subr.mxu0 0.0
    %1131 = vmatpush1.msra.mxu0 %v1128
    %1132 = vmatprep.subr.mxu0 0.0
    %1133 = vmatpush1.msra.mxu0 0.0
    %1134 = vmatprep.subr.mxu0 0.0
    %1135 = vmatpush1.msra.mxu0 0.0
    %1136 = vmatprep.subr.mxu0 0.0
    %1137 = vmatpush1.msra.mxu0 0.0
    %1138 = vmatprep.subr.mxu0 0.0
    %1139 = vmatpush1.msra.mxu0 0.0
    %1140 = vmatprep.subr.mxu0 0.0
    %1141 = vmatpush1.msra.mxu0 0.0
    %1142 = vmatprep.subr.mxu0 0.0
    %1143 = vmatpush1.msra.mxu0 0.0
    %1144 = vmatprep.subr.mxu0 0.0
    %1145 = vmatpush1.msra.mxu0 0.0
    %1146 = vmatprep.subr.mxu0 0.0
    %1147 = vmatpush1.msra.mxu0 0.0
    %1148 = vmatprep.subr.mxu0 0.0
    %1149 = vmatpush1.msra.mxu0 0.0
    %1150 = vmatprep.subr.mxu0 0.0
    %1151 = vmatpush1.msra.mxu0 0.0
    %1152 = vmatprep.subr.mxu0 0.0
    %1153 = vmatpush1.msra.mxu0 0.0
    %1154 = vmatprep.subr.mxu0 0.0
    %1155 = vmatpush1.msra.mxu0 0.0
    %1156 = vmatprep.subr.mxu0 0.0
    %1157 = vmatpush1.msra.mxu0 0.0
    %1158 = vmatprep.subr.mxu0 0.0
    %1159 = vmatpush1.msra.mxu0 0.0
    %1160 = vmatprep.subr.mxu0 0.0
    %1161 = vmatpush1.msra.mxu0 0.0
    %1162 = vmatprep.subr.mxu0 0.0
    %1163 = vmatpush1.msra.mxu0 0.0
    %1164 = vmatprep.subr.mxu0 0.0
    %1165 = vmatpush1.msra.mxu0 0.0
    %1166 = vmatprep.subr.mxu0 0.0
    %1167 = vmatpush1.msra.mxu0 0.0
    %1168 = vmatprep.subr.mxu0 0.0
    %1169 = vmatpush1.msra.mxu0 0.0
    %1170 = vmatprep.subr.mxu0 0.0
    %1171 = vmatpush1.msra.mxu0 0.0
    %1172 = vmatprep.subr.mxu0 0.0
    %1173 = vmatpush1.msra.mxu0 0.0
    %1174 = vmatprep.subr.mxu0 0.0
    %1175 = vmatpush1.msra.mxu0 0.0
    %1176 = vmatprep.subr.mxu0 0.0
    %1177 = vmatpush1.msra.mxu0 0.0
    %1178 = vmatprep.subr.mxu0 0.0
    %1179 = vmatpush1.msra.mxu0 0.0
    %1180 = vmatprep.subr.mxu0 0.0
    %1181 = vmatpush1.msra.mxu0 0.0
    %1182 = vmatprep.subr.mxu0 0.0
    %1183 = vmatpush1.msra.mxu0 0.0
    %1184 = vmatprep.subr.mxu0 0.0
    %1185 = vmatpush1.msra.mxu0 0.0
    %1186 = vmatprep.subr.mxu0 0.0
    %1187 = vmatpush1.msra.mxu0 0.0
    %1188 = vmatprep.subr.mxu0 0.0
    %1189 = vmatpush1.msra.mxu0 0.0
    %1190 = vmatprep.subr.mxu0 0.0
    %1191 = vmatpush1.msra.mxu0 0.0
    %1192 = vmatprep.subr.mxu0 0.0
    %1193 = vmatpush1.msra.mxu0 0.0
    %1194 = vmatprep.mubr.f32.mxu0 0.0
    %1195 = vmatmul.mubr.f32.gmra.mrb[0].mxu0 %v1125
    %v1196 = vpop.f32.mrb[0].mxu0
    %v1197 = vadd.f32 0.0, %v1196
    %v1198 = vpop.f32.mrb[0].mxu0
    %1199 = vdwg.mxu0
    %v1200 = vmul.f32 %v1119, %v1197
    %v1201 = vld [vmem:[%s10] sm:$0xff]
    %v1202 = vld [vmem:[%s10 + $0x8] sm:$0xff]
    %v1203 = vld [vmem:[%s10 + $0x10] sm:$0xff]
    %v1204 = vld [vmem:[%s10 + $0x18] sm:$0xff]
    %v1205 = vld [vmem:[%s11] sm:$0x1]
    %v1207 = vlaneseq
    %v1208 = vshrl.u32 %v1207, 7
    %v1209 = vsub.s32 0, %v1208
    %v1210 = vrot.slane %v1205, %v1209
    %v1213 = vsel %vm978, %v1200, 0
    %1215 = vmatprep.subr.mxu0 0.0
    %1216 = vmatpush1.msra.mxu0 %v1201
    %1217 = vmatprep.subr.mxu0 0.0
    %1218 = vmatpush1.msra.mxu0 %v1202
    %1219 = vmatprep.subr.mxu0 0.0
    %1220 = vmatpush1.msra.mxu0 %v1203
    %1221 = vmatprep.subr.mxu0 0.0
    %1222 = vmatpush1.msra.mxu0 %v1204
    %1223 = vmatprep.subr.mxu0 0.0
    %1224 = vmatpush1.msra.mxu0 0.0
    %1225 = vmatprep.subr.mxu0 0.0
    %1226 = vmatpush1.msra.mxu0 0.0
    %1227 = vmatprep.subr.mxu0 0.0
    %1228 = vmatpush1.msra.mxu0 0.0
    %1229 = vmatprep.subr.mxu0 0.0
    %1230 = vmatpush1.msra.mxu0 0.0
    %1231 = vmatprep.subr.mxu0 0.0
    %1232 = vmatpush1.msra.mxu0 0.0
    %1233 = vmatprep.subr.mxu0 0.0
    %1234 = vmatpush1.msra.mxu0 0.0
    %1235 = vmatprep.subr.mxu0 0.0
    %1236 = vmatpush1.msra.mxu0 0.0
    %1237 = vmatprep.subr.mxu0 0.0
    %1238 = vmatpush1.msra.mxu0 0.0
    %1239 = vmatprep.subr.mxu0 0.0
    %1240 = vmatpush1.msra.mxu0 0.0
    %1241 = vmatprep.subr.mxu0 0.0
    %1242 = vmatpush1.msra.mxu0 0.0
    %1243 = vmatprep.subr.mxu0 0.0
    %1244 = vmatpush1.msra.mxu0 0.0
    %1245 = vmatprep.subr.mxu0 0.0
    %1246 = vmatpush1.msra.mxu0 0.0
    %1247 = vmatprep.subr.mxu0 0.0
    %1248 = vmatpush1.msra.mxu0 0.0
    %1249 = vmatprep.subr.mxu0 0.0
    %1250 = vmatpush1.msra.mxu0 0.0
    %1251 = vmatprep.subr.mxu0 0.0
    %1252 = vmatpush1.msra.mxu0 0.0
    %1253 = vmatprep.subr.mxu0 0.0
    %1254 = vmatpush1.msra.mxu0 0.0
    %1255 = vmatprep.subr.mxu0 0.0
    %1256 = vmatpush1.msra.mxu0 0.0
    %1257 = vmatprep.subr.mxu0 0.0
    %1258 = vmatpush1.msra.mxu0 0.0
    %1259 = vmatprep.subr.mxu0 0.0
    %1260 = vmatpush1.msra.mxu0 0.0
    %1261 = vmatprep.subr.mxu0 0.0
    %1262 = vmatpush1.msra.mxu0 0.0
    %1263 = vmatprep.subr.mxu0 0.0
    %1264 = vmatpush1.msra.mxu0 0.0
    %1265 = vmatprep.subr.mxu0 0.0
    %1266 = vmatpush1.msra.mxu0 0.0
    %1267 = vmatprep.subr.mxu0 0.0
    %1268 = vmatpush1.msra.mxu0 0.0
    %1269 = vmatprep.subr.mxu0 0.0
    %1270 = vmatpush1.msra.mxu0 0.0
    %1271 = vmatprep.subr.mxu0 0.0
    %1272 = vmatpush1.msra.mxu0 0.0
    %1273 = vmatprep.subr.mxu0 0.0
    %1274 = vmatpush1.msra.mxu0 0.0
    %1275 = vmatprep.subr.mxu0 0.0
    %1276 = vmatpush1.msra.mxu0 0.0
    %1277 = vmatprep.subr.mxu0 0.0
    %1278 = vmatpush1.msra.mxu0 0.0
    %1279 = vmatprep.mubr.f32.mxu0 0.0
    %1280 = vmatmul.mubr.f32.gmra.mrb[0].mxu0 %v1213
    %v1281 = vpop.f32.mrb[0].mxu0
    %v1282 = vadd.f32 %v1210, %v1281
    %v1283 = vpop.f32.mrb[0].mxu0
    %1284 = vdwg.mxu0
    %v1285 = vmax.f32 %v1282, 0.0
    %v1286 = vld [vmem:[%s12] sm:$0xff]
    %v1287 = vld [vmem:[%s12 + $0x8] sm:$0xff]
    %v1288 = vld [vmem:[%s12 + $0x10] sm:$0xff]
    %v1289 = vld [vmem:[%s12 + $0x18] sm:$0xff]
    %v1290 = vld [vmem:[%s13] sm:$0x1]
    %v1292 = vlaneseq
    %v1293 = vshrl.u32 %v1292, 7
    %v1294 = vsub.s32 0, %v1293
    %v1295 = vrot.slane %v1290, %v1294
    %v1298 = vsel %vm978, %v1285, 0
    %1300 = vmatprep.subr.mxu0 0.0
    %1301 = vmatpush1.msra.mxu0 %v1286
    %1302 = vmatprep.subr.mxu0 0.0
    %1303 = vmatpush1.msra.mxu0 %v1287
    %1304 = vmatprep.subr.mxu0 0.0
    %1305 = vmatpush1.msra.mxu0 %v1288
    %1306 = vmatprep.subr.mxu0 0.0
    %1307 = vmatpush1.msra.mxu0 %v1289
    %1308 = vmatprep.subr.mxu0 0.0
    %1309 = vmatpush1.msra.mxu0 0.0
    %1310 = vmatprep.subr.mxu0 0.0
    %1311 = vmatpush1.msra.mxu0 0.0
    %1312 = vmatprep.subr.mxu0 0.0
    %1313 = vmatpush1.msra.mxu0 0.0
    %1314 = vmatprep.subr.mxu0 0.0
    %1315 = vmatpush1.msra.mxu0 0.0
    %1316 = vmatprep.subr.mxu0 0.0
    %1317 = vmatpush1.msra.mxu0 0.0
    %1318 = vmatprep.subr.mxu0 0.0
    %1319 = vmatpush1.msra.mxu0 0.0
    %1320 = vmatprep.subr.mxu0 0.0
    %1321 = vmatpush1.msra.mxu0 0.0
    %1322 = vmatprep.subr.mxu0 0.0
    %1323 = vmatpush1.msra.mxu0 0.0
    %1324 = vmatprep.subr.mxu0 0.0
    %1325 = vmatpush1.msra.mxu0 0.0
    %1326 = vmatprep.subr.mxu0 0.0
    %1327 = vmatpush1.msra.mxu0 0.0
    %1328 = vmatprep.subr.mxu0 0.0
    %1329 = vmatpush1.msra.mxu0 0.0
    %1330 = vmatprep.subr.mxu0 0.0
    %1331 = vmatpush1.msra.mxu0 0.0
    %1332 = vmatprep.subr.mxu0 0.0
    %1333 = vmatpush1.msra.mxu0 0.0
    %1334 = vmatprep.subr.mxu0 0.0
    %1335 = vmatpush1.msra.mxu0 0.0
    %1336 = vmatprep.subr.mxu0 0.0
    %1337 = vmatpush1.msra.mxu0 0.0
    %1338 = vmatprep.subr.mxu0 0.0
    %1339 = vmatpush1.msra.mxu0 0.0
    %1340 = vmatprep.subr.mxu0 0.0
    %1341 = vmatpush1.msra.mxu0 0.0
    %1342 = vmatprep.subr.mxu0 0.0
    %1343 = vmatpush1.msra.mxu0 0.0
    %1344 = vmatprep.subr.mxu0 0.0
    %1345 = vmatpush1.msra.mxu0 0.0
    %1346 = vmatprep.subr.mxu0 0.0
    %1347 = vmatpush1.msra.mxu0 0.0
    %1348 = vmatprep.subr.mxu0 0.0
    %1349 = vmatpush1.msra.mxu0 0.0
    %1350 = vmatprep.subr.mxu0 0.0
    %1351 = vmatpush1.msra.mxu0 0.0
    %1352 = vmatprep.subr.mxu0 0.0
    %1353 = vmatpush1.msra.mxu0 0.0
    %1354 = vmatprep.subr.mxu0 0.0
    %1355 = vmatpush1.msra.mxu0 0.0
    %1356 = vmatprep.subr.mxu0 0.0
    %1357 = vmatpush1.msra.mxu0 0.0
    %1358 = vmatprep.subr.mxu0 0.0
    %1359 = vmatpush1.msra.mxu0 0.0
    %1360 = vmatprep.subr.mxu0 0.0
    %1361 = vmatpush1.msra.mxu0 0.0
    %1362 = vmatprep.subr.mxu0 0.0
    %1363 = vmatpush1.msra.mxu0 0.0
    %1364 = vmatprep.mubr.f32.mxu0 0.0
    %1365 = vmatmul.mubr.f32.gmra.mrb[0].mxu0 %v1298
    %v1366 = vpop.f32.mrb[0].mxu0
    %v1367 = vadd.f32 %v1295, %v1366
    %v1368 = vpop.f32.mrb[0].mxu0
    %1369 = vdwg.mxu0
    %v1370 = vmax.f32 %v1367, 0.0
    %1371 = vst.msk [vmem:[#allocation2] sm:$0xff] %vm794, %v1370
    // Predicated region
    $region58: #{stem_forward.1} parent=1 // pred_check
      _
    $region59: #{stem_forward.1} parent=1 // pred_check_branch
      %1373 = sbr.rel (0) target = $region61
    $region60: #{stem_forward.1} parent=1 // pred_region
      %s1375 = ssub.s32 128, 128
      %1376 = vsyncadd [#allocation3], %s1375
      %s1378 = sshll.u32 [#allocation2], 4
      %s1379 = int_to_ptr.vmem [resolvable:$true] %s1378
      %1381 = dma.vmem_to_hbm [thread:$0]  %s1379, 128, %s14, [#allocation3]
    $region61: #{stem_forward.1} parent=1 // pred_fallthru
      _
    // Predicated region
    $region62: #{stem_forward.1} parent=1 // pred_check
      _
    $region63: #{stem_forward.1} parent=1 // pred_check_branch
      %1383 = sbr.rel (0) target = $region65
    $region64: #{stem_forward.1} parent=1 // pred_region
      %1384 = dma.done [#allocation3], 128
    $region65: #{stem_forward.1} parent=1 // pred_fallthru
      _
    %1385 = vsyncpa [#allocation3], 1

</llo_original>
